<compile_context>
chip_gen: v5e
topology: v5e:2x2
jax: 0.10.0
libtpu: 0.0.40
codegen_flags: <defaults>
</compile_context>

<pallas_src>
import functools

import jax
import jax.numpy as jnp
from jax.experimental import pallas as pl
from jax.experimental.pallas import tpu as pltpu


def _round_up(x, m):
    return ((x + m - 1) // m) * m


def _union_rgcn_kernel(start_ref, cnt_ref,            # scalar prefetch (SMEM)
                       dst_ref, msg_ref,              # edge-tiled
                       h_ref, prevh_ref, meta_ref,    # node-tiled
                       wneigh_ref, wloop_ref, wskip_ref, skipb_ref,  # constants
                       out_ref,                        # output
                       acc_ref,                        # scratch
                       *, d_pad, tile_n):
    del start_ref  # only used by the index_maps
    i = pl.program_id(0)          # node-tile index (parallel)
    j = pl.program_id(1)          # per-node-tile edge-tile step (reduction, last)

    @pl.when(j == 0)
    def _():
        acc_ref[...] = jnp.zeros_like(acc_ref)

    # Only edge tiles that actually overlap this node tile's dst range do work;
    # later steps re-see a clamped (already resident) tile and are skipped.
    @pl.when(j < cnt_ref[i])
    def _():
        tile_e = dst_ref.shape[1]
        # One-hot scatter tile built in-kernel from dst (never materialized in HBM).
        # Subtract the node-tile base from dst ([1, tile_e]) instead of adding it to
        # the [tile_n, tile_e] iota; padded edges carry dst = -1 and never match.
        dst_local = dst_ref[...] - i * tile_n                        # [1, tE] i32
        row_ids = jax.lax.broadcasted_iota(jnp.int32, (tile_n, tile_e), 0)
        onehot = (dst_local == row_ids).astype(jnp.float32)          # [tN, tE]
        # reduce (fn.sum): scatter-add via one-hot matmul, f32 accumulation.
        acc_ref[...] += jnp.dot(onehot, msg_ref[...],
                                preferred_element_type=jnp.float32)  # [tN, D]

    @pl.when(j == pl.num_programs(1) - 1)
    def _():
        agg = acc_ref[...]                                           # [tN, D] f32
        meta = meta_ref[...]                                         # [tN, 2]
        norm = meta[:, 0:1]
        degm = meta[:, 1:2]

        # apply_func: h = (sum_e msg) @ W_neighbor * norm
        # (agg @ W == sum_e onehot*(msg_e @ W): exact algebraic rewrite.)
        h_msg = jnp.dot(agg, wneigh_ref[...],
                        preferred_element_type=jnp.float32) * norm

        # self-loop: single fused matmul against [W_loop | W_evolve], per-node
        # select by in-degree.
        loop_both = jnp.dot(h_ref[...], wloop_ref[...],
                            preferred_element_type=jnp.float32)      # [tN, 2D]
        loop_message = jnp.where(degm > 0.0,
                                 loop_both[:, :d_pad], loop_both[:, d_pad:])

        # skip-connection gate: sigmoid(prev_h @ W_skip + b_skip)
        prev = prevh_ref[...]
        skip_w = jax.nn.sigmoid(
            jnp.dot(prev, wskip_ref[...], preferred_element_type=jnp.float32)
            + skipb_ref[...])

        node_repr = h_msg + loop_message
        node_repr = skip_w * node_repr + (1.0 - skip_w) * prev

        # activation (relu)
        out_ref[...] = jnp.maximum(node_repr, 0.0).astype(out_ref.dtype)
        # TODO(synk): dropout is stochastic train-time behaviour; dropout=0.0 here (no-op).


def union_rgcn_layer2_forward(h, prev_h, emb_rel, src, dst, etype, fre, norm,
                              params, *, tile_n=256, tile_e=2048,
                              out_dtype=jnp.float32):
    """Glue (gathers, global softmax, dst-sort schedule, padding) + Pallas call.

    Note: the per-node-tile edge-tile schedule is data-dependent, so this wrapper
    is meant to be called with concrete arrays (the pallas_call itself is the
    compiled hot path).  out_dtype=jnp.bfloat16 halves output writeback bytes if
    the consumer accepts it.
    """
    n_nodes, d = h.shape
    n_edges = src.shape[0]

    d_pad = _round_up(d, 128)
    tile_n = min(tile_n, _round_up(n_nodes, 128))
    # v7x megacore: prefer >= 2 node tiles so the 'parallel' axis shards across
    # both TensorCores.
    if tile_n > 128 and _round_up(n_nodes, tile_n) // tile_n < 2:
        tile_n = 128
    tile_e = min(tile_e, _round_up(n_edges, 128))
    n_pad = _round_up(n_nodes, tile_n)
    e_pad = _round_up(n_edges, tile_e)
    n_tiles = n_pad // tile_n
    e_tiles = e_pad // tile_e

    def pad2(x, rows, cols):
        return jnp.pad(x, ((0, rows - x.shape[0]), (0, cols - x.shape[1])))

    # --- global softmax over all edges + fused edge message (precomputed ONCE,
    #     kept in f32 so the ~1/E relation term isn't rounded away) ---
    fre_sm = jax.nn.softmax(fre.astype(jnp.float32).reshape(n_edges, 1), axis=0)
    msg = (h[src].astype(jnp.float32)
           + emb_rel[etype].astype(jnp.float32) * fre_sm)             # [E, D] f32

    # --- schedule: sort edges by dst; per node tile, the relevant edges are a
    #     contiguous range -> contiguous edge tiles [start_tile, start_tile+cnt) ---
    order = jnp.argsort(dst)
    dst_sorted = dst[order].astype(jnp.int32)
    msg_sorted = msg[order]

    bounds = jnp.arange(n_tiles + 1, dtype=jnp.int32) * tile_n
    pos = jnp.searchsorted(dst_sorted, bounds, side="left").astype(jnp.int32)
    lo, hi = pos[:-1], pos[1:]
    has_edges = hi > lo
    start_tile = jnp.where(has_edges, lo // tile_e, 0).astype(jnp.int32)
    end_tile = jnp.where(has_edges, (hi + tile_e - 1) // tile_e, 0).astype(jnp.int32)
    cnt_tiles = (end_tile - start_tile).astype(jnp.int32)
    # static trip-count of the per-node-tile edge loop (>=1 so the epilogue runs)
    max_tiles = max(int(jnp.max(cnt_tiles)), 1)
    visited_edge_tiles = max(int(jnp.sum(cnt_tiles)), 1)

    # --- in-degree mask + norm folded into a single lane-dense side array ---
    deg = jnp.zeros((n_nodes,), jnp.float32).at[dst].add(1.0)
    meta = jnp.stack([norm.astype(jnp.float32).reshape(n_nodes),
                      (deg > 0.0).astype(jnp.float32)], axis=1)        # [N, 2]

    # --- padding (padded edges get dst = -1 -> never match any row id) ---
    dst_p = jnp.pad(dst_sorted, (0, e_pad - n_edges),
                    constant_values=-1).reshape(1, e_pad)
    msg_p = pad2(msg_sorted, e_pad, d_pad)
    h_p = pad2(h.astype(jnp.float32), n_pad, d_pad)
    prev_p = pad2(prev_h.astype(jnp.float32), n_pad, d_pad)
    meta_p = pad2(meta, n_pad, 2)

    w_neigh_p = pad2(params["weight_neighbor"].astype(jnp.float32), d_pad, d_pad)
    w_loop_cat = jnp.concatenate(
        [pad2(params["loop_weight"].astype(jnp.float32), d_pad, d_pad),
         pad2(params["evolve_loop_weight"].astype(jnp.float32), d_pad, d_pad)],
        axis=1)                                                         # [D, 2D]
    w_skip_p = pad2(params["skip_connect_weight"].astype(jnp.float32), d_pad, d_pad)
    skip_b_p = pad2(params["skip_connect_bias"].reshape(1, d).astype(jnp.float32),
                    1, d_pad)

    grid = (n_tiles, max_tiles)
    last_e_tile = e_tiles - 1

    def edge_tile_idx(i, j, start_ref):
        # clamp so idle steps (j >= cnt[i]) re-reference an already-resident tile
        return jnp.minimum(start_ref[i] + j, last_e_tile)

    in_specs = [
        # edge-tiled (data-dependent via scalar-prefetch offsets)
        pl.BlockSpec((1, tile_e),
                     lambda i, j, s, c: (0, edge_tile_idx(i, j, s))),   # dst
        pl.BlockSpec((tile_e, d_pad),
                     lambda i, j, s, c: (edge_tile_idx(i, j, s), 0)),   # msg
        # node-tiled (resident across the edge/reduction axis)
        pl.BlockSpec((tile_n, d_pad), lambda i, j, s, c: (i, 0)),       # h
        pl.BlockSpec((tile_n, d_pad), lambda i, j, s, c: (i, 0)),       # prev_h
        pl.BlockSpec((tile_n, 2), lambda i, j, s, c: (i, 0)),           # [norm|deg]
        # constant weight blocks
        pl.BlockSpec((d_pad, d_pad), lambda i, j, s, c: (0, 0)),        # W_neighbor
        pl.BlockSpec((d_pad, 2 * d_pad), lambda i, j, s, c: (0, 0)),    # [W_loop|W_evolve]
        pl.BlockSpec((d_pad, d_pad), lambda i, j, s, c: (0, 0)),        # W_skip
        pl.BlockSpec((1, d_pad), lambda i, j, s, c: (0, 0)),            # skip bias
    ]
    out_spec = pl.BlockSpec((tile_n, d_pad), lambda i, j, s, c: (i, 0))

    out_bytes = jnp.dtype(out_dtype).itemsize
    # honest VMEM budget: account for sublane (8) / lane (128) padding of narrow blocks
    blk_bytes = (
        8 * tile_e * 4                      # dst block (1, tile_e) sublane-padded to 8
        + tile_e * d_pad * 4                # msg block (f32)
        + 2 * tile_n * d_pad * 4            # h + prev_h blocks
        + tile_n * 128 * 4                  # [norm|deg] block lane-padded to 128
        + d_pad * d_pad * 4                 # W_neighbor
        + d_pad * 2 * d_pad * 4             # [W_loop|W_evolve]
        + d_pad * d_pad * 4                 # W_skip
        + 8 * d_pad * 4                     # skip bias sublane-padded
        + tile_n * d_pad * out_bytes        # out block
    )
    vmem_limit = int(min(max(2 * blk_bytes + tile_n * d_pad * 4 + (1 << 20),
                             16 * 1024 * 1024),
                         60 * 1024 * 1024))

    # honest cost estimate: edge stream volume = edge tiles actually visited
    flops = (2 * visited_edge_tiles * tile_e * tile_n * d_pad
             + 8 * n_pad * d_pad * d_pad)
    bytes_accessed = int(
        visited_edge_tiles * tile_e * (d_pad * 4 + 4)          # msg + dst streams
        + n_pad * (2 * d_pad * 4 + 2 * 4)                      # h, prev_h, meta
        + (4 * d_pad * d_pad + d_pad) * 4                      # weights + bias
        + n_pad * d_pad * out_bytes)                           # output

    kernel = functools.partial(_union_rgcn_kernel, d_pad=d_pad, tile_n=tile_n)

    out_pad = pl.pallas_call(
        kernel,
        out_shape=jax.ShapeDtypeStruct((n_pad, d_pad), out_dtype),
        grid_spec=pltpu.PrefetchScalarGridSpec(
            num_scalar_prefetch=2,
            grid=grid,
            in_specs=in_specs,
            out_specs=out_spec,
            scratch_shapes=[pltpu.VMEM((tile_n, d_pad), jnp.float32)]),
        compiler_params=pltpu.CompilerParams(
            dimension_semantics=("parallel", "arbitrary"),
            vmem_limit_bytes=vmem_limit),
        cost_estimate=pl.CostEstimate(
            flops=int(flops),
            transcendentals=int(n_pad * d_pad),
            bytes_accessed=bytes_accessed),
    )(start_tile, cnt_tiles, dst_p, msg_p, h_p, prev_p, meta_p,
      w_neigh_p, w_loop_cat, w_skip_p, skip_b_p)

    return out_pad[:n_nodes, :d]


def _reference_forward(h, prev_h, emb_rel, src, dst, etype, fre, norm, params):
    """Pure-JAX port of UnionRGCNLayer2.forward (self_loop, skip_connect, relu)."""
    n_nodes = h.shape[0]
    n_edges = src.shape[0]
    fre_sm = jax.nn.softmax(fre.astype(jnp.float32).reshape(n_edges, 1), axis=0)
    msg = (h[src] + emb_rel[etype] * fre_sm) @ params["weight_neighbor"]
    agg = jnp.zeros_like(h).at[dst].add(msg)
    h_new = agg * norm
    deg = jnp.zeros((n_nodes,), jnp.float32).at[dst].add(1.0)
    loop_message = jnp.where((deg > 0.0)[:, None],
                             h @ params["loop_weight"],
                             h @ params["evolve_loop_weight"])
    skip_w = jax.nn.sigmoid(prev_h @ params["skip_connect_weight"]
                            + params["skip_connect_bias"])
    node_repr = h_new + loop_message
    node_repr = skip_w * node_repr + (1.0 - skip_w) * prev_h
    return jnp.maximum(node_repr, 0.0)


def _xavier_uniform(key, shape, gain):
    fan_in, fan_out = shape[0], shape[1]
    a = gain * jnp.sqrt(6.0 / (fan_in + fan_out))
    return jax.random.uniform(key, shape, jnp.float32, -a, a)


def init_params(key, in_feat, out_feat):
    gain = jnp.sqrt(2.0)  # nn.init.calculate_gain('relu')
    ks = jax.random.split(key, 7)
    return {
        # present in __init__, unused in forward (kept for parity)
        "weight_t": jax.random.normal(ks[0], (1, in_feat), jnp.float32),
        "bias_t": jax.random.normal(ks[1], (1, in_feat), jnp.float32),
        "weight_neighbor": _xavier_uniform(ks[2], (in_feat, out_feat), gain),
        "loop_weight": _xavier_uniform(ks[3], (in_feat, out_feat), gain),
        "evolve_loop_weight": _xavier_uniform(ks[4], (in_feat, out_feat), gain),
        "skip_connect_weight": _xavier_uniform(ks[5], (out_feat, out_feat), gain),
        "skip_connect_bias": jnp.zeros((out_feat,), jnp.float32),
    }


if __name__ == "__main__":
    # Small synthetic graph. in_feat == out_feat (required by msg_func's view).
    N_NODES, N_EDGES, D, N_RELS = 16, 64, 32, 8

    key = jax.random.PRNGKey(0)
    (k_h, k_prev, k_rel, k_src, k_dst, k_type, k_fre, k_norm, k_par) = (
        jax.random.split(key, 9))

    h = jax.random.normal(k_h, (N_NODES, D), jnp.float32)          # g.ndata['h']
    prev_h = jax.random.normal(k_prev, (N_NODES, D), jnp.float32)
    emb_rel = jax.random.normal(k_rel, (N_RELS, D), jnp.float32)
    src = jax.random.randint(k_src, (N_EDGES,), 0, N_NODES, jnp.int32)
    dst = jax.random.randint(k_dst, (N_EDGES,), 0, N_NODES, jnp.int32)
    etype = jax.random.randint(k_type, (N_EDGES,), 0, N_RELS, jnp.int32)
    fre = jax.random.randint(k_fre, (N_EDGES,), 1, 10, jnp.int32)   # edge freq
    norm = jax.random.uniform(k_norm, (N_NODES, 1), jnp.float32, 0.1, 1.0)

    params = init_params(k_par, D, D)

    out = union_rgcn_layer2_forward(h, prev_h, emb_rel, src, dst, etype, fre,
                                    norm, params)
    jax.block_until_ready(out)

    ref = _reference_forward(h, prev_h, emb_rel, src, dst, etype, fre, norm, params)

    assert out.shape == (N_NODES, D) and out.dtype == jnp.float32
    assert bool(jnp.all(jnp.isfinite(out)))
    max_err = float(jnp.max(jnp.abs(out - ref)))
    assert bool(jnp.allclose(out, ref, rtol=1e-3, atol=1e-3)), f"max_err={max_err}"
    print("KERNEL_OK")
</pallas_src>

<mosaic_0001>
module attributes {stable_mosaic.version = 11 : i64} {
  func.func @_union_rgcn_kernel(%arg0: i32, %arg1: i32, %arg2: memref<1xi32, #tpu.memory_space<smem>>, %arg3: memref<1xi32, #tpu.memory_space<smem>>, %arg4: memref<1x128xi32, #tpu.memory_space<vmem>>, %arg5: memref<128x128xf32, #tpu.memory_space<vmem>>, %arg6: memref<128x128xf32, #tpu.memory_space<vmem>>, %arg7: memref<128x128xf32, #tpu.memory_space<vmem>>, %arg8: memref<128x2xf32, #tpu.memory_space<vmem>>, %arg9: memref<128x128xf32, #tpu.memory_space<vmem>>, %arg10: memref<128x256xf32, #tpu.memory_space<vmem>>, %arg11: memref<128x128xf32, #tpu.memory_space<vmem>>, %arg12: memref<1x128xf32, #tpu.memory_space<vmem>>, %arg13: memref<128x128xf32, #tpu.memory_space<vmem>>, %arg14: memref<128x128xf32, #tpu.memory_space<vmem>>) attributes {dimension_semantics = [#tpu.dimension_semantics<parallel>, #tpu.dimension_semantics<arbitrary>], iteration_bounds = array<i64: 1, 1>, scalar_prefetch = 2 : i64, scratch_operands = 1 : i64, tpu.core_type = #tpu.core_type<tc>, window_params = [{transform_indices = @transform_0, window_bounds = array<i64: 1, 128>}, {transform_indices = @transform_1, window_bounds = array<i64: 128, 128>}, {transform_indices = @transform_2, window_bounds = array<i64: 128, 128>}, {transform_indices = @transform_3, window_bounds = array<i64: 128, 128>}, {transform_indices = @transform_4, window_bounds = array<i64: 128, 2>}, {pipeline_mode = #tpu.pipeline_mode<synchronous>, transform_indices = @transform_5, window_bounds = array<i64: 128, 128>}, {pipeline_mode = #tpu.pipeline_mode<synchronous>, transform_indices = @transform_6, window_bounds = array<i64: 128, 256>}, {pipeline_mode = #tpu.pipeline_mode<synchronous>, transform_indices = @transform_7, window_bounds = array<i64: 128, 128>}, {pipeline_mode = #tpu.pipeline_mode<synchronous>, transform_indices = @transform_8, window_bounds = array<i64: 1, 128>}, {transform_indices = @transform_9, window_bounds = array<i64: 128, 128>}]} {
    %c0_i32 = arith.constant 0 : i32
    %0 = arith.cmpi eq, %arg1, %c0_i32 : i32
    %1 = arith.extui %0 : i1 to i32
    %c0_i32_0 = arith.constant 0 : i32
    %2 = arith.cmpi ne, %1, %c0_i32_0 : i32
    scf.if %2 {
      %cst = arith.constant 0.000000e+00 : f32
      %11 = vector.broadcast %cst : f32 to vector<128x128xf32>
      %c0 = arith.constant 0 : index
      %c0_4 = arith.constant 0 : index
      %12 = vector.load %arg14[%c0, %c0_4] : memref<128x128xf32, #tpu.memory_space<vmem>>, vector<128x128xf32>
      tpu.vector_store %arg14[%c0, %c0_4], %11 {strides = array<i32>} : memref<128x128xf32, #tpu.memory_space<vmem>>, vector<128x128xf32>,
    } else {
    }
    %3 = arith.index_cast %arg0 : i32 to index
    %4 = memref.load %arg3[%3] : memref<1xi32, #tpu.memory_space<smem>>
    %5 = arith.cmpi slt, %arg1, %4 : i32
    %6 = arith.extui %5 : i1 to i32
    %c0_i32_1 = arith.constant 0 : i32
    %7 = arith.cmpi ne, %6, %c0_i32_1 : i32
    scf.if %7 {
      %c0 = arith.constant 0 : index
      %c0_4 = arith.constant 0 : index
      %11 = vector.load %arg4[%c0, %c0_4] : memref<1x128xi32, #tpu.memory_space<vmem>>, vector<1x128xi32>
      %c128_i32 = arith.constant 128 : i32
      %12 = arith.muli %arg0, %c128_i32 : i32
      %13 = vector.broadcast %12 : i32 to vector<1x128xi32>
      %14 = arith.subi %11, %13 : vector<1x128xi32>
      %15 = tpu.iota {dimensions = array<i32: 0>} : vector<128x128xi32>
      %16 = vector.broadcast %14 : vector<1x128xi32> to vector<128x128xi32>
      %17 = arith.cmpi eq, %16, %15 : vector<128x128xi32>
      %18 = arith.extui %17 : vector<128x128xi1> to vector<128x128xi32>
      %19 = arith.sitofp %18 : vector<128x128xi32> to vector<128x128xf32>
      %c0_5 = arith.constant 0 : index
      %c0_6 = arith.constant 0 : index
      %20 = vector.load %arg14[%c0_5, %c0_6] : memref<128x128xf32, #tpu.memory_space<vmem>>, vector<128x128xf32>
      %c0_7 = arith.constant 0 : index
      %c0_8 = arith.constant 0 : index
      %21 = vector.load %arg5[%c0_7, %c0_8] : memref<128x128xf32, #tpu.memory_space<vmem>>, vector<128x128xf32>
      %cst = arith.constant dense<0.000000e+00> : vector<128x128xf32>
      %22 = tpu.matmul %19, %21, %cst {dimension_numbers = #tpu.dot_dimension_numbers<[1], [0], [0], [1], [0, 0, 1, 1], [], []>} : vector<128x128xf32>, vector<128x128xf32>, vector<128x128xf32> -> vector<128x128xf32>
      %23 = arith.addf %20, %22 : vector<128x128xf32>
      %c0_9 = arith.constant 0 : index
      %c0_10 = arith.constant 0 : index
      %24 = vector.load %arg14[%c0_9, %c0_10] : memref<128x128xf32, #tpu.memory_space<vmem>>, vector<128x128xf32>
      tpu.vector_store %arg14[%c0_9, %c0_10], %23 {strides = array<i32>} : memref<128x128xf32, #tpu.memory_space<vmem>>, vector<128x128xf32>,
    } else {
    }
    %c0_i32_2 = arith.constant 0 : i32
    %8 = arith.cmpi eq, %arg1, %c0_i32_2 : i32
    %9 = arith.extui %8 : i1 to i32
    %c0_i32_3 = arith.constant 0 : i32
    %10 = arith.cmpi ne, %9, %c0_i32_3 : i32
    scf.if %10 {
      %c0 = arith.constant 0 : index
      %c0_4 = arith.constant 0 : index
      %11 = vector.load %arg14[%c0, %c0_4] : memref<128x128xf32, #tpu.memory_space<vmem>>, vector<128x128xf32>
      %c0_5 = arith.constant 0 : index
      %c0_6 = arith.constant 0 : index
      %12 = vector.load %arg8[%c0_5, %c0_6] : memref<128x2xf32, #tpu.memory_space<vmem>>, vector<128x2xf32>
      %13 = vector.extract_strided_slice %12 {offsets = [0, 0], sizes = [128, 1], strides = [1, 1]} : vector<128x2xf32> to vector<128x1xf32>
      %14 = vector.extract_strided_slice %12 {offsets = [0, 1], sizes = [128, 1], strides = [1, 1]} : vector<128x2xf32> to vector<128x1xf32>
      %c0_7 = arith.constant 0 : index
      %c0_8 = arith.constant 0 : index
      %15 = vector.load %arg9[%c0_7, %c0_8] : memref<128x128xf32, #tpu.memory_space<vmem>>, vector<128x128xf32>
      %cst = arith.constant dense<0.000000e+00> : vector<128x128xf32>
      %16 = tpu.matmul %11, %15, %cst {dimension_numbers = #tpu.dot_dimension_numbers<[1], [0], [0], [1], [0, 0, 1, 1], [], []>} : vector<128x128xf32>, vector<128x128xf32>, vector<128x128xf32> -> vector<128x128xf32>
      %17 = vector.broadcast %13 : vector<128x1xf32> to vector<128x128xf32>
      %18 = arith.mulf %16, %17 : vector<128x128xf32>
      %c0_9 = arith.constant 0 : index
      %c0_10 = arith.constant 0 : index
      %19 = vector.load %arg6[%c0_9, %c0_10] : memref<128x128xf32, #tpu.memory_space<vmem>>, vector<128x128xf32>
      %c0_11 = arith.constant 0 : index
      %c0_12 = arith.constant 0 : index
      %20 = vector.load %arg10[%c0_11, %c0_12] : memref<128x256xf32, #tpu.memory_space<vmem>>, vector<128x256xf32>
      %cst_13 = arith.constant dense<0.000000e+00> : vector<128x256xf32>
      %21 = tpu.matmul %19, %20, %cst_13 {dimension_numbers = #tpu.dot_dimension_numbers<[1], [0], [0], [1], [0, 0, 1, 1], [], []>} : vector<128x128xf32>, vector<128x256xf32>, vector<128x256xf32> -> vector<128x256xf32>
      %cst_14 = arith.constant 0.000000e+00 : f32
      %22 = vector.broadcast %cst_14 : f32 to vector<128x1xf32>
      %23 = arith.cmpf ogt, %14, %22 : vector<128x1xf32>
      %24 = vector.extract_strided_slice %21 {offsets = [0, 0], sizes = [128, 128], strides = [1, 1]} : vector<128x256xf32> to vector<128x128xf32>
      %25 = vector.extract_strided_slice %21 {offsets = [0, 128], sizes = [128, 128], strides = [1, 1]} : vector<128x256xf32> to vector<128x128xf32>
      %26 = vector.shape_cast %23 : vector<128x1xi1> to vector<128x1xi1>
      %27 = vector.broadcast %26 : vector<128x1xi1> to vector<128x128xi1>
      %28 = arith.select %27, %24, %25 : vector<128x128xi1>, vector<128x128xf32>
      %c0_15 = arith.constant 0 : index
      %c0_16 = arith.constant 0 : index
      %29 = vector.load %arg7[%c0_15, %c0_16] : memref<128x128xf32, #tpu.memory_space<vmem>>, vector<128x128xf32>
      %c0_17 = arith.constant 0 : index
      %c0_18 = arith.constant 0 : index
      %30 = vector.load %arg11[%c0_17, %c0_18] : memref<128x128xf32, #tpu.memory_space<vmem>>, vector<128x128xf32>
      %cst_19 = arith.constant dense<0.000000e+00> : vector<128x128xf32>
      %31 = tpu.matmul %29, %30, %cst_19 {dimension_numbers = #tpu.dot_dimension_numbers<[1], [0], [0], [1], [0, 0, 1, 1], [], []>} : vector<128x128xf32>, vector<128x128xf32>, vector<128x128xf32> -> vector<128x128xf32>
      %c0_20 = arith.constant 0 : index
      %c0_21 = arith.constant 0 : index
      %32 = vector.load %arg12[%c0_20, %c0_21] : memref<1x128xf32, #tpu.memory_space<vmem>>, vector<1x128xf32>
      %33 = vector.broadcast %32 : vector<1x128xf32> to vector<128x128xf32>
      %34 = arith.addf %31, %33 : vector<128x128xf32>
      %35 = arith.negf %34 : vector<128x128xf32>
      %36 = math.exp %35 : vector<128x128xf32>
      %cst_22 = arith.constant 1.000000e+00 : f32
      %37 = vector.broadcast %cst_22 : f32 to vector<128x128xf32>
      %38 = arith.addf %37, %36 : vector<128x128xf32>
      %39 = arith.divf %37, %38 : vector<128x128xf32>
      %40 = arith.addf %18, %28 : vector<128x128xf32>
      %41 = arith.mulf %39, %40 : vector<128x128xf32>
      %cst_23 = arith.constant 1.000000e+00 : f32
      %42 = vector.broadcast %cst_23 : f32 to vector<128x128xf32>
      %43 = arith.subf %42, %39 : vector<128x128xf32>
      %44 = arith.mulf %43, %29 : vector<128x128xf32>
      %45 = arith.addf %41, %44 : vector<128x128xf32>
      %cst_24 = arith.constant 0.000000e+00 : f32
      %46 = vector.broadcast %cst_24 : f32 to vector<128x128xf32>
      %47 = arith.maximumf %45, %46 : vector<128x128xf32>
      %c0_25 = arith.constant 0 : index
      %c0_26 = arith.constant 0 : index
      %48 = vector.load %arg13[%c0_25, %c0_26] : memref<128x128xf32, #tpu.memory_space<vmem>>, vector<128x128xf32>
      tpu.vector_store %arg13[%c0_25, %c0_26], %47 {strides = array<i32>} : memref<128x128xf32, #tpu.memory_space<vmem>>, vector<128x128xf32>,
    } else {
    }
    return
  }
  func.func @transform_0(%arg0: i32, %arg1: i32, %arg2: memref<1xi32, #tpu.memory_space<smem>>, %arg3: memref<1xi32, #tpu.memory_space<smem>>) -> (i32, i32) {
    %0 = arith.index_cast %arg0 : i32 to index
    %1 = memref.load %arg2[%0] : memref<1xi32, #tpu.memory_space<smem>>
    %2 = arith.addi %1, %arg1 : i32
    %c0_i32 = arith.constant 0 : i32
    %3 = arith.minsi %2, %c0_i32 : i32
    %c0_i32_0 = arith.constant 0 : i32
    %c0_i32_1 = arith.constant 0 : i32
    return %c0_i32_0, %3 : i32, i32
  }
  func.func @transform_1(%arg0: i32, %arg1: i32, %arg2: memref<1xi32, #tpu.memory_space<smem>>, %arg3: memref<1xi32, #tpu.memory_space<smem>>) -> (i32, i32) {
    %0 = arith.index_cast %arg0 : i32 to index
    %1 = memref.load %arg2[%0] : memref<1xi32, #tpu.memory_space<smem>>
    %2 = arith.addi %1, %arg1 : i32
    %c0_i32 = arith.constant 0 : i32
    %3 = arith.minsi %2, %c0_i32 : i32
    %c0_i32_0 = arith.constant 0 : i32
    %c0_i32_1 = arith.constant 0 : i32
    return %3, %c0_i32_0 : i32, i32
  }
  func.func @transform_2(%arg0: i32, %arg1: i32, %arg2: memref<1xi32, #tpu.memory_space<smem>>, %arg3: memref<1xi32, #tpu.memory_space<smem>>) -> (i32, i32) {
    %c0_i32 = arith.constant 0 : i32
    %c0_i32_0 = arith.constant 0 : i32
    return %arg0, %c0_i32 : i32, i32
  }
  func.func @transform_3(%arg0: i32, %arg1: i32, %arg2: memref<1xi32, #tpu.memory_space<smem>>, %arg3: memref<1xi32, #tpu.memory_space<smem>>) -> (i32, i32) {
    %c0_i32 = arith.constant 0 : i32
    %c0_i32_0 = arith.constant 0 : i32
    return %arg0, %c0_i32 : i32, i32
  }
  func.func @transform_4(%arg0: i32, %arg1: i32, %arg2: memref<1xi32, #tpu.memory_space<smem>>, %arg3: memref<1xi32, #tpu.memory_space<smem>>) -> (i32, i32) {
    %c0_i32 = arith.constant 0 : i32
    %c0_i32_0 = arith.constant 0 : i32
    return %arg0, %c0_i32 : i32, i32
  }
  func.func @transform_5(%arg0: i32, %arg1: i32, %arg2: memref<1xi32, #tpu.memory_space<smem>>, %arg3: memref<1xi32, #tpu.memory_space<smem>>) -> (i32, i32) {
    %c0_i32 = arith.constant 0 : i32
    %c0_i32_0 = arith.constant 0 : i32
    %c0_i32_1 = arith.constant 0 : i32
    return %c0_i32, %c0_i32_0 : i32, i32
  }
  func.func @transform_6(%arg0: i32, %arg1: i32, %arg2: memref<1xi32, #tpu.memory_space<smem>>, %arg3: memref<1xi32, #tpu.memory_space<smem>>) -> (i32, i32) {
    %c0_i32 = arith.constant 0 : i32
    %c0_i32_0 = arith.constant 0 : i32
    %c0_i32_1 = arith.constant 0 : i32
    return %c0_i32, %c0_i32_0 : i32, i32
  }
  func.func @transform_7(%arg0: i32, %arg1: i32, %arg2: memref<1xi32, #tpu.memory_space<smem>>, %arg3: memref<1xi32, #tpu.memory_space<smem>>) -> (i32, i32) {
    %c0_i32 = arith.constant 0 : i32
    %c0_i32_0 = arith.constant 0 : i32
    %c0_i32_1 = arith.constant 0 : i32
    return %c0_i32, %c0_i32_0 : i32, i32
  }
  func.func @transform_8(%arg0: i32, %arg1: i32, %arg2: memref<1xi32, #tpu.memory_space<smem>>, %arg3: memref<1xi32, #tpu.memory_space<smem>>) -> (i32, i32) {
    %c0_i32 = arith.constant 0 : i32
    %c0_i32_0 = arith.constant 0 : i32
    %c0_i32_1 = arith.constant 0 : i32
    return %c0_i32, %c0_i32_0 : i32, i32
  }
  func.func @transform_9(%arg0: i32, %arg1: i32, %arg2: memref<1xi32, #tpu.memory_space<smem>>, %arg3: memref<1xi32, #tpu.memory_space<smem>>) -> (i32, i32) {
    %c0_i32 = arith.constant 0 : i32
    %c0_i32_0 = arith.constant 0 : i32
    return %arg0, %c0_i32 : i32, i32
  }
}

</mosaic_0001>

<llo_original>
// kernel: tpu_custom_call.1
$region0: #{tpu_custom_call.1}
  #allocation0 [shape = 'u32[]', space=smem, size = 0x4, offset = 0x4, fixed_abs, tag = 'smem constant byte address 0x4 - core index']
  #allocation1 [shape = 'u32[72,128]{1,0:T(1,128)}', space=vmem, size = 0x9000, scoped, tag = 'internal scratch']
  #allocation2 [shape = 'f32[128,128]{1,0:T(8,128)}', space=vmem, size = 0x10000, scoped, tag = 'scratch operand']
  #allocation3 [shape = 's32[1]{0}', space=sflag, size = 0x4, scoped, tag = 'scoped memory for tpu_custom_call.1']
  #allocation4 [shape = 's32[1]{0:T(128)S(6)}', space=smem, size = 0x200, scoped, tag = 'prefetched SMEM operand 0']
  #allocation5 [shape = 's32[1]{0:T(128)S(6)}', space=smem, size = 0x200, scoped, tag = 'prefetched SMEM operand 1']
  %s0 = inlined_call_operand.<no memory space> [shape: s32[1], index: 0, kind: input, shape index: {}]
  %s1 = inlined_call_operand.<no memory space> [shape: s32[1], index: 1, kind: input, shape index: {}]
  %s2 = inlined_call_operand.vmem [shape: s32[1,128], index: 2, kind: input, shape index: {}]
  %s3 = inlined_call_operand.vmem [shape: f32[128,128], index: 3, kind: input, shape index: {}]
  %s4 = inlined_call_operand.hbm [shape: f32[128,128], index: 4, kind: input, shape index: {}]
  %s5 = inlined_call_operand.hbm [shape: f32[128,128], index: 5, kind: input, shape index: {}]
  %s6 = inlined_call_operand.vmem [shape: f32[128,2], index: 6, kind: input, shape index: {}]
  %s7 = inlined_call_operand.hbm [shape: f32[128,128], index: 7, kind: input, shape index: {}]
  %s8 = inlined_call_operand.hbm [shape: f32[128,256], index: 8, kind: input, shape index: {}]
  %s9 = inlined_call_operand.hbm [shape: f32[128,128], index: 9, kind: input, shape index: {}]
  %s10 = inlined_call_operand.vmem [shape: f32[1,128], index: 10, kind: input, shape index: {}]
  %s11 = inlined_call_operand.hbm [shape: f32[128,128], index: 11, kind: output, shape index: {}]
  %s12 = sld [smem:[#allocation0]]
  $region78: #{tpu_custom_call.1} parent=0
    _
  %s14 = ssub.s32 1, %s12
  %s15 = scalar_select 0, %s14, %s12
  %16 = sst [smem:[#allocation4]] %s0
  %17 = sst [smem:[#allocation5]] %s1
  $region1: #{tpu_custom_call.1} parent=0
    #allocation6 [shape = 'u8[65536]{0}', space=vmem, size = 0x10000, scoped, tag = 'input window, operand 4, single buffered']
    #allocation7 [shape = 's32[1]{0}', space=sflag, size = 0x4, scoped, tag = 'scoped memory for tpu_custom_call.1']
    #allocation8 [shape = 's32[1]{0}', space=sflag, size = 0x4, scoped, tag = 'scoped memory for tpu_custom_call.1']
    #allocation9 [shape = 'u8[65536]{0}', space=vmem, size = 0x10000, scoped, tag = 'input window, operand 5, single buffered']
    #allocation10 [shape = 's32[1]{0}', space=sflag, size = 0x4, scoped, tag = 'scoped memory for tpu_custom_call.1']
    #allocation11 [shape = 'u8[65536]{0}', space=vmem, size = 0x10000, scoped, tag = 'input window, operand 7, single buffered']
    #allocation12 [shape = 'u8[131072]{0}', space=vmem, size = 0x20000, scoped, tag = 'input window, operand 8, single buffered']
    #allocation13 [shape = 's32[1]{0}', space=sflag, size = 0x4, scoped, tag = 'scoped memory for tpu_custom_call.1']
    #allocation14 [shape = 'u8[65536]{0}', space=vmem, size = 0x10000, scoped, tag = 'input window, operand 9, single buffered']
    #allocation15 [shape = 'u8[65536]{0}', space=vmem, size = 0x10000, scoped, tag = 'output window, operand 0, single buffered']
    %18 = vsyncpa [#allocation7], 0
    %19 = vsyncpa [#allocation10], 0
    %20 = vsyncpa [#allocation13], 0
    %21 = vsyncpa [#allocation8], 0
    // Predicated region
    $region2: #{tpu_custom_call.1} parent=1 // pred_check
      _
    $region3: #{tpu_custom_call.1} parent=1 // pred_check_branch
      %23 = sbr.rel (0) target = $region5
    $region4: #{tpu_custom_call.1} parent=1 // pred_region
      %s24 = sld [smem:[#allocation4]]
      %s25 = sadd.s32 %s24, 0
      %p26 = scmp.lt.s32.totalorder %s25, 0
      %s27 = scalar_select %p26, %s25, 0
      %p28 = scmp.lt.s32.totalorder %s27, 0
      %s29 = scalar_select %p28, %s27, 0
      %s30 = scalar_lea.vmem %s2, %s29
      %s31 = sld [smem:[#allocation4]]
      %s32 = sadd.s32 %s31, 0
      %p33 = scmp.lt.s32.totalorder %s32, 0
      %s34 = scalar_select %p33, %s32, 0
    $region5: #{tpu_custom_call.1} parent=1 // pred_fallthru
      _
    // Predicated region
    $region6: #{tpu_custom_call.1} parent=1 // pred_check
      _
    $region7: #{tpu_custom_call.1} parent=1 // pred_check_branch
      %36 = sbr.rel (0) target = $region9
    $region8: #{tpu_custom_call.1} parent=1 // pred_region
      %s37 = sld [smem:[#allocation4]]
      %s38 = sadd.s32 %s37, 0
      %p39 = scmp.lt.s32.totalorder %s38, 0
      %s40 = scalar_select %p39, %s38, 0
      %s41 = smul.u32 16, %s40
      %p42 = scmp.lt.s32.totalorder %s41, 15
      %s43 = scalar_select %p42, %s41, 15
      %s44 = smul.addr %s43, 8
      %s45 = scalar_lea.vmem %s3, %s44
      %s46 = sld [smem:[#allocation4]]
      %s47 = sadd.s32 %s46, 0
      %p48 = scmp.lt.s32.totalorder %s47, 0
      %s49 = scalar_select %p48, %s47, 0
      %s50 = smul.u32 16, %s49
    $region9: #{tpu_custom_call.1} parent=1 // pred_fallthru
      _
    // Predicated region
    $region10: #{tpu_custom_call.1} parent=1 // pred_check
      _
    $region11: #{tpu_custom_call.1} parent=1 // pred_check_branch
      %52 = sbr.rel (0) target = $region13
    $region12: #{tpu_custom_call.1} parent=1 // pred_region
      %54 = vsyncadd [#allocation7], 0
      %s55 = sshll.u32 %s4, 4
      %s56 = int_to_ptr.hbm [resolvable:$true] %s55
      %s57 = sshll.u32 [#allocation6], 4
      %s58 = int_to_ptr.vmem [resolvable:$true] %s57
      %63 = dma.hbm_to_vmem [thread:$0]  %s56, 2048, %s58, [#allocation7], 128, 128, 8
    $region13: #{tpu_custom_call.1} parent=1 // pred_fallthru
      _
    // Predicated region
    $region14: #{tpu_custom_call.1} parent=1 // pred_check
      _
    $region15: #{tpu_custom_call.1} parent=1 // pred_check_branch
      %65 = sbr.rel (0) target = $region17
    $region16: #{tpu_custom_call.1} parent=1 // pred_region
      %67 = vsyncadd [#allocation10], 0
      %s68 = sshll.u32 %s5, 4
      %s69 = int_to_ptr.hbm [resolvable:$true] %s68
      %s70 = sshll.u32 [#allocation9], 4
      %s71 = int_to_ptr.vmem [resolvable:$true] %s70
      %76 = dma.hbm_to_vmem [thread:$0]  %s69, 2048, %s71, [#allocation10], 128, 128, 8
    $region17: #{tpu_custom_call.1} parent=1 // pred_fallthru
      _
    // Predicated region
    $region18: #{tpu_custom_call.1} parent=1 // pred_check
      _
    $region19: #{tpu_custom_call.1} parent=1 // pred_check_branch
      %78 = sbr.rel (0) target = $region21
    $region20: #{tpu_custom_call.1} parent=1 // pred_region
      _
    $region21: #{tpu_custom_call.1} parent=1 // pred_fallthru
      _
    // Predicated region
    $region22: #{tpu_custom_call.1} parent=1 // pred_check
      _
    $region23: #{tpu_custom_call.1} parent=1 // pred_check_branch
      %80 = sbr.rel (0) target = $region25
    $region24: #{tpu_custom_call.1} parent=1 // pred_region
      %82 = vsyncadd [#allocation10], 0
      %s83 = sshll.u32 %s7, 4
      %s84 = int_to_ptr.hbm [resolvable:$true] %s83
      %s85 = sshll.u32 [#allocation11], 4
      %s86 = int_to_ptr.vmem [resolvable:$true] %s85
      %91 = dma.hbm_to_vmem [thread:$0]  %s84, 2048, %s86, [#allocation10], 128, 128, 8
    $region25: #{tpu_custom_call.1} parent=1 // pred_fallthru
      _
    // Predicated region
    $region26: #{tpu_custom_call.1} parent=1 // pred_check
      _
    $region27: #{tpu_custom_call.1} parent=1 // pred_check_branch
      %93 = sbr.rel (0) target = $region29
    $region28: #{tpu_custom_call.1} parent=1 // pred_region
      %95 = vsyncadd [#allocation13], 0
      %s96 = sshll.u32 %s8, 4
      %s97 = int_to_ptr.hbm [resolvable:$true] %s96
      %s98 = sshll.u32 [#allocation12], 4
      %s99 = int_to_ptr.vmem [resolvable:$true] %s98
      %104 = dma.hbm_to_vmem [thread:$0]  %s97, 4096, %s99, [#allocation13], 256, 256, 16
    $region29: #{tpu_custom_call.1} parent=1 // pred_fallthru
      _
    // Predicated region
    $region30: #{tpu_custom_call.1} parent=1 // pred_check
      _
    $region31: #{tpu_custom_call.1} parent=1 // pred_check_branch
      %106 = sbr.rel (0) target = $region33
    $region32: #{tpu_custom_call.1} parent=1 // pred_region
      %108 = vsyncadd [#allocation13], 0
      %s109 = sshll.u32 %s9, 4
      %s110 = int_to_ptr.hbm [resolvable:$true] %s109
      %s111 = sshll.u32 [#allocation14], 4
      %s112 = int_to_ptr.vmem [resolvable:$true] %s111
      %117 = dma.hbm_to_vmem [thread:$0]  %s110, 2048, %s112, [#allocation13], 128, 128, 8
    $region33: #{tpu_custom_call.1} parent=1 // pred_fallthru
      _
    // Predicated region
    $region34: #{tpu_custom_call.1} parent=1 // pred_check
      _
    $region35: #{tpu_custom_call.1} parent=1 // pred_check_branch
      %119 = sbr.rel (0) target = $region37
    $region36: #{tpu_custom_call.1} parent=1 // pred_region
      _
    $region37: #{tpu_custom_call.1} parent=1 // pred_fallthru
      _
    // Predicated region
    $region38: #{tpu_custom_call.1} parent=1 // pred_check
      _
    $region39: #{tpu_custom_call.1} parent=1 // pred_check_branch
      %121 = sbr.rel (0) target = $region41
    $region40: #{tpu_custom_call.1} parent=1 // pred_region
      %123 = dma.done [#allocation7], 2048
    $region41: #{tpu_custom_call.1} parent=1 // pred_fallthru
      _
    // Predicated region
    $region42: #{tpu_custom_call.1} parent=1 // pred_check
      _
    $region43: #{tpu_custom_call.1} parent=1 // pred_check_branch
      %125 = sbr.rel (0) target = $region45
    $region44: #{tpu_custom_call.1} parent=1 // pred_region
      %127 = dma.done [#allocation10], 2048
    $region45: #{tpu_custom_call.1} parent=1 // pred_fallthru
      _
    // Predicated region
    $region46: #{tpu_custom_call.1} parent=1 // pred_check
      _
    $region47: #{tpu_custom_call.1} parent=1 // pred_check_branch
      %129 = sbr.rel (0) target = $region49
    $region48: #{tpu_custom_call.1} parent=1 // pred_region
      %131 = dma.done [#allocation10], 2048
    $region49: #{tpu_custom_call.1} parent=1 // pred_fallthru
      _
    // Predicated region
    $region50: #{tpu_custom_call.1} parent=1 // pred_check
      _
    $region51: #{tpu_custom_call.1} parent=1 // pred_check_branch
      %133 = sbr.rel (0) target = $region53
    $region52: #{tpu_custom_call.1} parent=1 // pred_region
      %135 = dma.done [#allocation13], 4096
    $region53: #{tpu_custom_call.1} parent=1 // pred_fallthru
      _
    // Predicated region
    $region54: #{tpu_custom_call.1} parent=1 // pred_check
      _
    $region55: #{tpu_custom_call.1} parent=1 // pred_check_branch
      %137 = sbr.rel (0) target = $region57
    $region56: #{tpu_custom_call.1} parent=1 // pred_region
      %139 = dma.done [#allocation13], 2048
    $region57: #{tpu_custom_call.1} parent=1 // pred_fallthru
      _
    %s140 = sld [smem:[#allocation4]]
    %s141 = sadd.s32 %s140, 0
    %p142 = scmp.lt.s32.totalorder %s141, 0
    %s143 = scalar_select %p142, %s141, 0
    %p144 = scmp.lt.s32.totalorder %s143, 0
    %s145 = scalar_select %p144, %s143, 0
    %s146 = scalar_lea.vmem %s2, %s145
    %s147 = sld [smem:[#allocation4]]
    %s148 = sadd.s32 %s147, 0
    %p149 = scmp.lt.s32.totalorder %s148, 0
    %s150 = scalar_select %p149, %s148, 0
    %s151 = smul.u32 16, %s150
    %p152 = scmp.lt.s32.totalorder %s151, 15
    %s153 = scalar_select %p152, %s151, 15
    %s154 = smul.addr %s153, 8
    %s155 = scalar_lea.vmem %s3, %s154
    %s156 = sld [smem:[#allocation4]]
    %s157 = sadd.s32 %s156, 0
    %p158 = scmp.lt.s32.totalorder %s157, 0
    %s159 = scalar_select %p158, %s157, 0
    %p160 = scmp.lt.s32.totalorder %s159, 0
    %s161 = scalar_select %p160, %s159, 0
    %s162 = scalar_lea.vmem %s2, %s161
    %s163 = sld [smem:[#allocation4]]
    %s164 = sadd.s32 %s163, 0
    %p165 = scmp.lt.s32.totalorder %s164, 0
    %s166 = scalar_select %p165, %s164, 0
    %s167 = sld [smem:[#allocation4]]
    %s168 = sadd.s32 %s167, 0
    %p169 = scmp.lt.s32.totalorder %s168, 0
    %s170 = scalar_select %p169, %s168, 0
    %s171 = smul.u32 16, %s170
    %p172 = scmp.lt.s32.totalorder %s171, 15
    %s173 = scalar_select %p172, %s171, 15
    %s174 = smul.addr %s173, 8
    %s175 = scalar_lea.vmem %s3, %s174
    %s176 = sld [smem:[#allocation4]]
    %s177 = sadd.s32 %s176, 0
    %p178 = scmp.lt.s32.totalorder %s177, 0
    %s179 = scalar_select %p178, %s177, 0
    %s180 = smul.u32 16, %s179
    %p181 = scmp.eq.s32.totalorder 0, 0
    // Predicated region
    $region58: #{tpu_custom_call.1} parent=1 // pred_check
      %p182 = pneg %p181
    $region59: #{tpu_custom_call.1} parent=1 // pred_check_branch
      %184 = sbr.rel (%p182) target = $region61
    $region60: #{tpu_custom_call.1} parent=1 // pred_region
      %185 = vst [vmem:[#allocation2] sm:$0xff] 0.0
      %186 = vst [vmem:[#allocation2 + $0x8] sm:$0xff] 0.0
      %187 = vst [vmem:[#allocation2 + $0x10] sm:$0xff] 0.0
      %188 = vst [vmem:[#allocation2 + $0x18] sm:$0xff] 0.0
      %189 = vst [vmem:[#allocation2 + $0x20] sm:$0xff] 0.0
      %190 = vst [vmem:[#allocation2 + $0x28] sm:$0xff] 0.0
      %191 = vst [vmem:[#allocation2 + $0x30] sm:$0xff] 0.0
      %192 = vst [vmem:[#allocation2 + $0x38] sm:$0xff] 0.0
      %193 = vst [vmem:[#allocation2 + $0x40] sm:$0xff] 0.0
      %194 = vst [vmem:[#allocation2 + $0x48] sm:$0xff] 0.0
      %195 = vst [vmem:[#allocation2 + $0x50] sm:$0xff] 0.0
      %196 = vst [vmem:[#allocation2 + $0x58] sm:$0xff] 0.0
      %197 = vst [vmem:[#allocation2 + $0x60] sm:$0xff] 0.0
      %198 = vst [vmem:[#allocation2 + $0x68] sm:$0xff] 0.0
      %199 = vst [vmem:[#allocation2 + $0x70] sm:$0xff] 0.0
      %200 = vst [vmem:[#allocation2 + $0x78] sm:$0xff] 0.0
    $region61: #{tpu_custom_call.1} parent=1 // pred_fallthru
      _
    %s201 = sld [smem:[#allocation5]]
    %p202 = scmp.lt.s32.totalorder 0, %s201
    // Predicated region
    $region62: #{tpu_custom_call.1} parent=1 // pred_check
      %p203 = pneg %p202
    $region63: #{tpu_custom_call.1} parent=1 // pred_check_branch
      %205 = sbr.rel (%p203) target = $region65
    $region64: #{tpu_custom_call.1} parent=1 // pred_region
      %v206 = vld [vmem:[%s162] sm:$0x1]
      %s207 = smul.u32 0, 128
      %v208 = vstv %s207
      %v209 = vsub.s32 %v206, %v208
      %v210 = vlaneseq
      %v211 = vshrl.u32 %v210, 7
      %v212 = vadd.s32 %v211, 8
      %v213 = vadd.s32 %v211, 16
      %v214 = vadd.s32 %v211, 24
      %v215 = vadd.s32 %v211, 32
      %v216 = vadd.s32 %v211, 40
      %v217 = vadd.s32 %v211, 48
      %v218 = vadd.s32 %v211, 56
      %v219 = vadd.s32 %v211, 64
      %v220 = vadd.s32 %v211, 72
      %v221 = vadd.s32 %v211, 80
      %v222 = vadd.s32 %v211, 88
      %v223 = vadd.s32 %v211, 96
      %v224 = vadd.s32 %v211, 104
      %v225 = vadd.s32 %v211, 112
      %v226 = vadd.s32 %v211, 120
      %v227 = vperm.slane %v209, 0
      %vm228 = vcmp.eq.s32.totalorder %v227, %v211
      %vm229 = vcmp.eq.s32.totalorder %v227, %v212
      %vm230 = vcmp.eq.s32.totalorder %v227, %v213
      %vm231 = vcmp.eq.s32.totalorder %v227, %v214
      %vm232 = vcmp.eq.s32.totalorder %v227, %v215
      %vm233 = vcmp.eq.s32.totalorder %v227, %v216
      %vm234 = vcmp.eq.s32.totalorder %v227, %v217
      %vm235 = vcmp.eq.s32.totalorder %v227, %v218
      %vm236 = vcmp.eq.s32.totalorder %v227, %v219
      %vm237 = vcmp.eq.s32.totalorder %v227, %v220
      %vm238 = vcmp.eq.s32.totalorder %v227, %v221
      %vm239 = vcmp.eq.s32.totalorder %v227, %v222
      %vm240 = vcmp.eq.s32.totalorder %v227, %v223
      %vm241 = vcmp.eq.s32.totalorder %v227, %v224
      %vm242 = vcmp.eq.s32.totalorder %v227, %v225
      %vm243 = vcmp.eq.s32.totalorder %v227, %v226
      %v244 = vsel %vm228, 1, 0
      %v245 = vsel %vm229, 1, 0
      %v246 = vsel %vm230, 1, 0
      %v247 = vsel %vm231, 1, 0
      %v248 = vsel %vm232, 1, 0
      %v249 = vsel %vm233, 1, 0
      %v250 = vsel %vm234, 1, 0
      %v251 = vsel %vm235, 1, 0
      %v252 = vsel %vm236, 1, 0
      %v253 = vsel %vm237, 1, 0
      %v254 = vsel %vm238, 1, 0
      %v255 = vsel %vm239, 1, 0
      %v256 = vsel %vm240, 1, 0
      %v257 = vsel %vm241, 1, 0
      %v258 = vsel %vm242, 1, 0
      %v259 = vsel %vm243, 1, 0
      %v260 = vcvt.s32.f32 %v244
      %v261 = vcvt.s32.f32 %v245
      %v262 = vcvt.s32.f32 %v246
      %v263 = vcvt.s32.f32 %v247
      %v264 = vcvt.s32.f32 %v248
      %v265 = vcvt.s32.f32 %v249
      %v266 = vcvt.s32.f32 %v250
      %v267 = vcvt.s32.f32 %v251
      %v268 = vcvt.s32.f32 %v252
      %v269 = vcvt.s32.f32 %v253
      %v270 = vcvt.s32.f32 %v254
      %v271 = vcvt.s32.f32 %v255
      %v272 = vcvt.s32.f32 %v256
      %v273 = vcvt.s32.f32 %v257
      %v274 = vcvt.s32.f32 %v258
      %v275 = vcvt.s32.f32 %v259
      %v276 = vld [vmem:[#allocation2] sm:$0xff]
      %v277 = vld [vmem:[#allocation2 + $0x8] sm:$0xff]
      %v278 = vld [vmem:[#allocation2 + $0x10] sm:$0xff]
      %v279 = vld [vmem:[#allocation2 + $0x18] sm:$0xff]
      %v280 = vld [vmem:[#allocation2 + $0x20] sm:$0xff]
      %v281 = vld [vmem:[#allocation2 + $0x28] sm:$0xff]
      %v282 = vld [vmem:[#allocation2 + $0x30] sm:$0xff]
      %v283 = vld [vmem:[#allocation2 + $0x38] sm:$0xff]
      %v284 = vld [vmem:[#allocation2 + $0x40] sm:$0xff]
      %v285 = vld [vmem:[#allocation2 + $0x48] sm:$0xff]
      %v286 = vld [vmem:[#allocation2 + $0x50] sm:$0xff]
      %v287 = vld [vmem:[#allocation2 + $0x58] sm:$0xff]
      %v288 = vld [vmem:[#allocation2 + $0x60] sm:$0xff]
      %v289 = vld [vmem:[#allocation2 + $0x68] sm:$0xff]
      %v290 = vld [vmem:[#allocation2 + $0x70] sm:$0xff]
      %v291 = vld [vmem:[#allocation2 + $0x78] sm:$0xff]
      %v292 = vld [vmem:[%s175] sm:$0xff]
      %v293 = vld [vmem:[%s175 + $0x8] sm:$0xff]
      %v294 = vld [vmem:[%s175 + $0x10] sm:$0xff]
      %v295 = vld [vmem:[%s175 + $0x18] sm:$0xff]
      %v296 = vld [vmem:[%s175 + $0x20] sm:$0xff]
      %v297 = vld [vmem:[%s175 + $0x28] sm:$0xff]
      %v298 = vld [vmem:[%s175 + $0x30] sm:$0xff]
      %v299 = vld [vmem:[%s175 + $0x38] sm:$0xff]
      %v300 = vld [vmem:[%s175 + $0x40] sm:$0xff]
      %v301 = vld [vmem:[%s175 + $0x48] sm:$0xff]
      %v302 = vld [vmem:[%s175 + $0x50] sm:$0xff]
      %v303 = vld [vmem:[%s175 + $0x58] sm:$0xff]
      %v304 = vld [vmem:[%s175 + $0x60] sm:$0xff]
      %v305 = vld [vmem:[%s175 + $0x68] sm:$0xff]
      %v306 = vld [vmem:[%s175 + $0x70] sm:$0xff]
      %v307 = vld [vmem:[%s175 + $0x78] sm:$0xff]
      %308 = vmatpush.msra.mxu0 %v307
      %309 = vmatpush.msra.mxu0 %v306
      %310 = vmatpush.msra.mxu0 %v305
      %311 = vmatpush.msra.mxu0 %v304
      %312 = vmatpush.msra.mxu0 %v303
      %313 = vmatpush.msra.mxu0 %v302
      %314 = vmatpush.msra.mxu0 %v301
      %315 = vmatpush.msra.mxu0 %v300
      %316 = vmatpush.msra.mxu0 %v299
      %317 = vmatpush.msra.mxu0 %v298
      %318 = vmatpush.msra.mxu0 %v297
      %319 = vmatpush.msra.mxu0 %v296
      %320 = vmatpush.msra.mxu0 %v295
      %321 = vmatpush.msra.mxu0 %v294
      %322 = vmatpush.msra.mxu0 %v293
      %323 = vmatpush.msra.mxu0 %v292
      %324 = vmatmul.f32.gmra.mxu0 %v260
      %v325 = vpop.f32.mrf.mxu0
      %v326 = vadd.f32 0.0, %v325
      %327 = vmatmul.f32.gmra.mxu0 %v261
      %v328 = vpop.f32.mrf.mxu0
      %v329 = vadd.f32 0.0, %v328
      %330 = vmatmul.f32.gmra.mxu0 %v262
      %v331 = vpop.f32.mrf.mxu0
      %v332 = vadd.f32 0.0, %v331
      %333 = vmatmul.f32.gmra.mxu0 %v263
      %v334 = vpop.f32.mrf.mxu0
      %v335 = vadd.f32 0.0, %v334
      %336 = vmatmul.f32.gmra.mxu0 %v264
      %v337 = vpop.f32.mrf.mxu0
      %v338 = vadd.f32 0.0, %v337
      %339 = vmatmul.f32.gmra.mxu0 %v265
      %v340 = vpop.f32.mrf.mxu0
      %v341 = vadd.f32 0.0, %v340
      %342 = vmatmul.f32.gmra.mxu0 %v266
      %v343 = vpop.f32.mrf.mxu0
      %v344 = vadd.f32 0.0, %v343
      %345 = vmatmul.f32.gmra.mxu0 %v267
      %v346 = vpop.f32.mrf.mxu0
      %v347 = vadd.f32 0.0, %v346
      %348 = vmatmul.f32.gmra.mxu0 %v268
      %v349 = vpop.f32.mrf.mxu0
      %v350 = vadd.f32 0.0, %v349
      %351 = vmatmul.f32.gmra.mxu0 %v269
      %v352 = vpop.f32.mrf.mxu0
      %v353 = vadd.f32 0.0, %v352
      %354 = vmatmul.f32.gmra.mxu0 %v270
      %v355 = vpop.f32.mrf.mxu0
      %v356 = vadd.f32 0.0, %v355
      %357 = vmatmul.f32.gmra.mxu0 %v271
      %v358 = vpop.f32.mrf.mxu0
      %v359 = vadd.f32 0.0, %v358
      %360 = vmatmul.f32.gmra.mxu0 %v272
      %v361 = vpop.f32.mrf.mxu0
      %v362 = vadd.f32 0.0, %v361
      %363 = vmatmul.f32.gmra.mxu0 %v273
      %v364 = vpop.f32.mrf.mxu0
      %v365 = vadd.f32 0.0, %v364
      %366 = vmatmul.f32.gmra.mxu0 %v274
      %v367 = vpop.f32.mrf.mxu0
      %v368 = vadd.f32 0.0, %v367
      %369 = vmatmul.f32.gmra.mxu0 %v275
      %v370 = vpop.f32.mrf.mxu0
      %v371 = vadd.f32 0.0, %v370
      %372 = vdwg.mxu0
      %v373 = vadd.f32 %v276, %v326
      %v374 = vadd.f32 %v277, %v329
      %v375 = vadd.f32 %v278, %v332
      %v376 = vadd.f32 %v279, %v335
      %v377 = vadd.f32 %v280, %v338
      %v378 = vadd.f32 %v281, %v341
      %v379 = vadd.f32 %v282, %v344
      %v380 = vadd.f32 %v283, %v347
      %v381 = vadd.f32 %v284, %v350
      %v382 = vadd.f32 %v285, %v353
      %v383 = vadd.f32 %v286, %v356
      %v384 = vadd.f32 %v287, %v359
      %v385 = vadd.f32 %v288, %v362
      %v386 = vadd.f32 %v289, %v365
      %v387 = vadd.f32 %v290, %v368
      %v388 = vadd.f32 %v291, %v371
      %389 = vst [vmem:[#allocation2] sm:$0xff] %v373
      %390 = vst [vmem:[#allocation2 + $0x8] sm:$0xff] %v374
      %391 = vst [vmem:[#allocation2 + $0x10] sm:$0xff] %v375
      %392 = vst [vmem:[#allocation2 + $0x18] sm:$0xff] %v376
      %393 = vst [vmem:[#allocation2 + $0x20] sm:$0xff] %v377
      %394 = vst [vmem:[#allocation2 + $0x28] sm:$0xff] %v378
      %395 = vst [vmem:[#allocation2 + $0x30] sm:$0xff] %v379
      %396 = vst [vmem:[#allocation2 + $0x38] sm:$0xff] %v380
      %397 = vst [vmem:[#allocation2 + $0x40] sm:$0xff] %v381
      %398 = vst [vmem:[#allocation2 + $0x48] sm:$0xff] %v382
      %399 = vst [vmem:[#allocation2 + $0x50] sm:$0xff] %v383
      %400 = vst [vmem:[#allocation2 + $0x58] sm:$0xff] %v384
      %401 = vst [vmem:[#allocation2 + $0x60] sm:$0xff] %v385
      %402 = vst [vmem:[#allocation2 + $0x68] sm:$0xff] %v386
      %403 = vst [vmem:[#allocation2 + $0x70] sm:$0xff] %v387
      %404 = vst [vmem:[#allocation2 + $0x78] sm:$0xff] %v388
    $region65: #{tpu_custom_call.1} parent=1 // pred_fallthru
      _
    // Predicated region
    $region66: #{tpu_custom_call.1} parent=1 // pred_check
      %p405 = pneg %p181
    $region67: #{tpu_custom_call.1} parent=1 // pred_check_branch
      %407 = sbr.rel (%p405) target = $region69
    $region68: #{tpu_custom_call.1} parent=1 // pred_region
      %v408 = vld [vmem:[#allocation2] sm:$0xff]
      %v409 = vld [vmem:[#allocation2 + $0x8] sm:$0xff]
      %v410 = vld [vmem:[#allocation2 + $0x10] sm:$0xff]
      %v411 = vld [vmem:[#allocation2 + $0x18] sm:$0xff]
      %v412 = vld [vmem:[#allocation2 + $0x20] sm:$0xff]
      %v413 = vld [vmem:[#allocation2 + $0x28] sm:$0xff]
      %v414 = vld [vmem:[#allocation2 + $0x30] sm:$0xff]
      %v415 = vld [vmem:[#allocation2 + $0x38] sm:$0xff]
      %v416 = vld [vmem:[#allocation2 + $0x40] sm:$0xff]
      %v417 = vld [vmem:[#allocation2 + $0x48] sm:$0xff]
      %v418 = vld [vmem:[#allocation2 + $0x50] sm:$0xff]
      %v419 = vld [vmem:[#allocation2 + $0x58] sm:$0xff]
      %v420 = vld [vmem:[#allocation2 + $0x60] sm:$0xff]
      %v421 = vld [vmem:[#allocation2 + $0x68] sm:$0xff]
      %v422 = vld [vmem:[#allocation2 + $0x70] sm:$0xff]
      %v423 = vld [vmem:[#allocation2 + $0x78] sm:$0xff]
      %v424 = vld [vmem:[%s6] sm:$0xff]
      %v425 = vld [vmem:[%s6 + $0x8] sm:$0xff]
      %v426 = vld [vmem:[%s6 + $0x10] sm:$0xff]
      %v427 = vld [vmem:[%s6 + $0x18] sm:$0xff]
      %v428 = vld [vmem:[%s6 + $0x20] sm:$0xff]
      %v429 = vld [vmem:[%s6 + $0x28] sm:$0xff]
      %v430 = vld [vmem:[%s6 + $0x30] sm:$0xff]
      %v431 = vld [vmem:[%s6 + $0x38] sm:$0xff]
      %v432 = vld [vmem:[%s6 + $0x40] sm:$0xff]
      %v433 = vld [vmem:[%s6 + $0x48] sm:$0xff]
      %v434 = vld [vmem:[%s6 + $0x50] sm:$0xff]
      %v435 = vld [vmem:[%s6 + $0x58] sm:$0xff]
      %v436 = vld [vmem:[%s6 + $0x60] sm:$0xff]
      %v437 = vld [vmem:[%s6 + $0x68] sm:$0xff]
      %v438 = vld [vmem:[%s6 + $0x70] sm:$0xff]
      %v439 = vld [vmem:[%s6 + $0x78] sm:$0xff]
      %v440 = vld [vmem:[#allocation11] sm:$0xff]
      %v441 = vld [vmem:[#allocation11 + $0x8] sm:$0xff]
      %v442 = vld [vmem:[#allocation11 + $0x10] sm:$0xff]
      %v443 = vld [vmem:[#allocation11 + $0x18] sm:$0xff]
      %v444 = vld [vmem:[#allocation11 + $0x20] sm:$0xff]
      %v445 = vld [vmem:[#allocation11 + $0x28] sm:$0xff]
      %v446 = vld [vmem:[#allocation11 + $0x30] sm:$0xff]
      %v447 = vld [vmem:[#allocation11 + $0x38] sm:$0xff]
      %v448 = vld [vmem:[#allocation11 + $0x40] sm:$0xff]
      %v449 = vld [vmem:[#allocation11 + $0x48] sm:$0xff]
      %v450 = vld [vmem:[#allocation11 + $0x50] sm:$0xff]
      %v451 = vld [vmem:[#allocation11 + $0x58] sm:$0xff]
      %v452 = vld [vmem:[#allocation11 + $0x60] sm:$0xff]
      %v453 = vld [vmem:[#allocation11 + $0x68] sm:$0xff]
      %v454 = vld [vmem:[#allocation11 + $0x70] sm:$0xff]
      %v455 = vld [vmem:[#allocation11 + $0x78] sm:$0xff]
      %456 = vmatpush.msra.mxu0 %v455
      %457 = vmatpush.msra.mxu0 %v454
      %458 = vmatpush.msra.mxu0 %v453
      %459 = vmatpush.msra.mxu0 %v452
      %460 = vmatpush.msra.mxu0 %v451
      %461 = vmatpush.msra.mxu0 %v450
      %462 = vmatpush.msra.mxu0 %v449
      %463 = vmatpush.msra.mxu0 %v448
      %464 = vmatpush.msra.mxu0 %v447
      %465 = vmatpush.msra.mxu0 %v446
      %466 = vmatpush.msra.mxu0 %v445
      %467 = vmatpush.msra.mxu0 %v444
      %468 = vmatpush.msra.mxu0 %v443
      %469 = vmatpush.msra.mxu0 %v442
      %470 = vmatpush.msra.mxu0 %v441
      %471 = vmatpush.msra.mxu0 %v440
      %472 = vmatmul.f32.gmra.mxu0 %v408
      %v473 = vpop.f32.mrf.mxu0
      %v474 = vadd.f32 0.0, %v473
      %475 = vmatmul.f32.gmra.mxu0 %v409
      %v476 = vpop.f32.mrf.mxu0
      %v477 = vadd.f32 0.0, %v476
      %478 = vmatmul.f32.gmra.mxu0 %v410
      %v479 = vpop.f32.mrf.mxu0
      %v480 = vadd.f32 0.0, %v479
      %481 = vmatmul.f32.gmra.mxu0 %v411
      %v482 = vpop.f32.mrf.mxu0
      %v483 = vadd.f32 0.0, %v482
      %484 = vmatmul.f32.gmra.mxu0 %v412
      %v485 = vpop.f32.mrf.mxu0
      %v486 = vadd.f32 0.0, %v485
      %487 = vmatmul.f32.gmra.mxu0 %v413
      %v488 = vpop.f32.mrf.mxu0
      %v489 = vadd.f32 0.0, %v488
      %490 = vmatmul.f32.gmra.mxu0 %v414
      %v491 = vpop.f32.mrf.mxu0
      %v492 = vadd.f32 0.0, %v491
      %493 = vmatmul.f32.gmra.mxu0 %v415
      %v494 = vpop.f32.mrf.mxu0
      %v495 = vadd.f32 0.0, %v494
      %496 = vmatmul.f32.gmra.mxu0 %v416
      %v497 = vpop.f32.mrf.mxu0
      %v498 = vadd.f32 0.0, %v497
      %499 = vmatmul.f32.gmra.mxu0 %v417
      %v500 = vpop.f32.mrf.mxu0
      %v501 = vadd.f32 0.0, %v500
      %502 = vmatmul.f32.gmra.mxu0 %v418
      %v503 = vpop.f32.mrf.mxu0
      %v504 = vadd.f32 0.0, %v503
      %505 = vmatmul.f32.gmra.mxu0 %v419
      %v506 = vpop.f32.mrf.mxu0
      %v507 = vadd.f32 0.0, %v506
      %508 = vmatmul.f32.gmra.mxu0 %v420
      %v509 = vpop.f32.mrf.mxu0
      %v510 = vadd.f32 0.0, %v509
      %511 = vmatmul.f32.gmra.mxu0 %v421
      %v512 = vpop.f32.mrf.mxu0
      %v513 = vadd.f32 0.0, %v512
      %514 = vmatmul.f32.gmra.mxu0 %v422
      %v515 = vpop.f32.mrf.mxu0
      %v516 = vadd.f32 0.0, %v515
      %517 = vmatmul.f32.gmra.mxu0 %v423
      %v518 = vpop.f32.mrf.mxu0
      %v519 = vadd.f32 0.0, %v518
      %520 = vdwg.mxu0
      %522 = vset.pattern.permute.xlu0 0
      %523 = vperm.xlu0 %522, %v424
      %v524 = vpop.permute.xlu0 %523
      %527 = vset.pattern.permute.xlu0 0
      %528 = vperm.xlu0 %527, %v425
      %v529 = vpop.permute.xlu0 %528
      %532 = vset.pattern.permute.xlu0 0
      %533 = vperm.xlu0 %532, %v426
      %v534 = vpop.permute.xlu0 %533
      %537 = vset.pattern.permute.xlu0 0
      %538 = vperm.xlu0 %537, %v427
      %v539 = vpop.permute.xlu0 %538
      %542 = vset.pattern.permute.xlu0 0
      %543 = vperm.xlu0 %542, %v428
      %v544 = vpop.permute.xlu0 %543
      %547 = vset.pattern.permute.xlu0 0
      %548 = vperm.xlu0 %547, %v429
      %v549 = vpop.permute.xlu0 %548
      %552 = vset.pattern.permute.xlu0 0
      %553 = vperm.xlu0 %552, %v430
      %v554 = vpop.permute.xlu0 %553
      %557 = vset.pattern.permute.xlu0 0
      %558 = vperm.xlu0 %557, %v431
      %v559 = vpop.permute.xlu0 %558
      %562 = vset.pattern.permute.xlu0 0
      %563 = vperm.xlu0 %562, %v432
      %v564 = vpop.permute.xlu0 %563
      %567 = vset.pattern.permute.xlu0 0
      %568 = vperm.xlu0 %567, %v433
      %v569 = vpop.permute.xlu0 %568
      %572 = vset.pattern.permute.xlu0 0
      %573 = vperm.xlu0 %572, %v434
      %v574 = vpop.permute.xlu0 %573
      %577 = vset.pattern.permute.xlu0 0
      %578 = vperm.xlu0 %577, %v435
      %v579 = vpop.permute.xlu0 %578
      %582 = vset.pattern.permute.xlu0 0
      %583 = vperm.xlu0 %582, %v436
      %v584 = vpop.permute.xlu0 %583
      %587 = vset.pattern.permute.xlu0 0
      %588 = vperm.xlu0 %587, %v437
      %v589 = vpop.permute.xlu0 %588
      %592 = vset.pattern.permute.xlu0 0
      %593 = vperm.xlu0 %592, %v438
      %v594 = vpop.permute.xlu0 %593
      %597 = vset.pattern.permute.xlu0 0
      %598 = vperm.xlu0 %597, %v439
      %v599 = vpop.permute.xlu0 %598
      %v601 = vmul.f32 %v474, %v524
      %v602 = vmul.f32 %v477, %v529
      %v603 = vmul.f32 %v480, %v534
      %v604 = vmul.f32 %v483, %v539
      %v605 = vmul.f32 %v486, %v544
      %v606 = vmul.f32 %v489, %v549
      %v607 = vmul.f32 %v492, %v554
      %v608 = vmul.f32 %v495, %v559
      %v609 = vmul.f32 %v498, %v564
      %v610 = vmul.f32 %v501, %v569
      %v611 = vmul.f32 %v504, %v574
      %v612 = vmul.f32 %v507, %v579
      %v613 = vmul.f32 %v510, %v584
      %v614 = vmul.f32 %v513, %v589
      %v615 = vmul.f32 %v516, %v594
      %v616 = vmul.f32 %v519, %v599
      %v617 = vld [vmem:[#allocation6] sm:$0xff]
      %v618 = vld [vmem:[#allocation6 + $0x8] sm:$0xff]
      %v619 = vld [vmem:[#allocation6 + $0x10] sm:$0xff]
      %v620 = vld [vmem:[#allocation6 + $0x18] sm:$0xff]
      %v621 = vld [vmem:[#allocation6 + $0x20] sm:$0xff]
      %v622 = vld [vmem:[#allocation6 + $0x28] sm:$0xff]
      %v623 = vld [vmem:[#allocation6 + $0x30] sm:$0xff]
      %v624 = vld [vmem:[#allocation6 + $0x38] sm:$0xff]
      %v625 = vld [vmem:[#allocation6 + $0x40] sm:$0xff]
      %v626 = vld [vmem:[#allocation6 + $0x48] sm:$0xff]
      %v627 = vld [vmem:[#allocation6 + $0x50] sm:$0xff]
      %v628 = vld [vmem:[#allocation6 + $0x58] sm:$0xff]
      %v629 = vld [vmem:[#allocation6 + $0x60] sm:$0xff]
      %v630 = vld [vmem:[#allocation6 + $0x68] sm:$0xff]
      %v631 = vld [vmem:[#allocation6 + $0x70] sm:$0xff]
      %v632 = vld [vmem:[#allocation6 + $0x78] sm:$0xff]
      %v633 = vld [vmem:[#allocation12] sm:$0xff]
      %v634 = vld [vmem:[#allocation12 + $0x8] sm:$0xff]
      %v635 = vld [vmem:[#allocation12 + $0x10] sm:$0xff]
      %v636 = vld [vmem:[#allocation12 + $0x18] sm:$0xff]
      %v637 = vld [vmem:[#allocation12 + $0x20] sm:$0xff]
      %v638 = vld [vmem:[#allocation12 + $0x28] sm:$0xff]
      %v639 = vld [vmem:[#allocation12 + $0x30] sm:$0xff]
      %v640 = vld [vmem:[#allocation12 + $0x38] sm:$0xff]
      %v641 = vld [vmem:[#allocation12 + $0x40] sm:$0xff]
      %v642 = vld [vmem:[#allocation12 + $0x48] sm:$0xff]
      %v643 = vld [vmem:[#allocation12 + $0x50] sm:$0xff]
      %v644 = vld [vmem:[#allocation12 + $0x58] sm:$0xff]
      %v645 = vld [vmem:[#allocation12 + $0x60] sm:$0xff]
      %v646 = vld [vmem:[#allocation12 + $0x68] sm:$0xff]
      %v647 = vld [vmem:[#allocation12 + $0x70] sm:$0xff]
      %v648 = vld [vmem:[#allocation12 + $0x78] sm:$0xff]
      %v649 = vld [vmem:[#allocation12 + $0x80] sm:$0xff]
      %v650 = vld [vmem:[#allocation12 + $0x88] sm:$0xff]
      %v651 = vld [vmem:[#allocation12 + $0x90] sm:$0xff]
      %v652 = vld [vmem:[#allocation12 + $0x98] sm:$0xff]
      %v653 = vld [vmem:[#allocation12 + $0xa0] sm:$0xff]
      %v654 = vld [vmem:[#allocation12 + $0xa8] sm:$0xff]
      %v655 = vld [vmem:[#allocation12 + $0xb0] sm:$0xff]
      %v656 = vld [vmem:[#allocation12 + $0xb8] sm:$0xff]
      %v657 = vld [vmem:[#allocation12 + $0xc0] sm:$0xff]
      %v658 = vld [vmem:[#allocation12 + $0xc8] sm:$0xff]
      %v659 = vld [vmem:[#allocation12 + $0xd0] sm:$0xff]
      %v660 = vld [vmem:[#allocation12 + $0xd8] sm:$0xff]
      %v661 = vld [vmem:[#allocation12 + $0xe0] sm:$0xff]
      %v662 = vld [vmem:[#allocation12 + $0xe8] sm:$0xff]
      %v663 = vld [vmem:[#allocation12 + $0xf0] sm:$0xff]
      %v664 = vld [vmem:[#allocation12 + $0xf8] sm:$0xff]
      %665 = vmatpush.msra.mxu0 %v663
      %666 = vmatpush.msra.mxu0 %v661
      %667 = vmatpush.msra.mxu0 %v659
      %668 = vmatpush.msra.mxu0 %v657
      %669 = vmatpush.msra.mxu0 %v655
      %670 = vmatpush.msra.mxu0 %v653
      %671 = vmatpush.msra.mxu0 %v651
      %672 = vmatpush.msra.mxu0 %v649
      %673 = vmatpush.msra.mxu0 %v647
      %674 = vmatpush.msra.mxu0 %v645
      %675 = vmatpush.msra.mxu0 %v643
      %676 = vmatpush.msra.mxu0 %v641
      %677 = vmatpush.msra.mxu0 %v639
      %678 = vmatpush.msra.mxu0 %v637
      %679 = vmatpush.msra.mxu0 %v635
      %680 = vmatpush.msra.mxu0 %v633
      %681 = vmatmul.f32.gmra.mxu0 %v617
      %v682 = vpop.f32.mrf.mxu0
      %v683 = vadd.f32 0.0, %v682
      %684 = vmatmul.f32.gmra.mxu0 %v618
      %v685 = vpop.f32.mrf.mxu0
      %v686 = vadd.f32 0.0, %v685
      %687 = vmatmul.f32.gmra.mxu0 %v619
      %v688 = vpop.f32.mrf.mxu0
      %v689 = vadd.f32 0.0, %v688
      %690 = vmatmul.f32.gmra.mxu0 %v620
      %v691 = vpop.f32.mrf.mxu0
      %v692 = vadd.f32 0.0, %v691
      %693 = vmatmul.f32.gmra.mxu0 %v621
      %v694 = vpop.f32.mrf.mxu0
      %v695 = vadd.f32 0.0, %v694
      %696 = vmatmul.f32.gmra.mxu0 %v622
      %v697 = vpop.f32.mrf.mxu0
      %v698 = vadd.f32 0.0, %v697
      %699 = vmatmul.f32.gmra.mxu0 %v623
      %v700 = vpop.f32.mrf.mxu0
      %v701 = vadd.f32 0.0, %v700
      %702 = vmatmul.f32.gmra.mxu0 %v624
      %v703 = vpop.f32.mrf.mxu0
      %v704 = vadd.f32 0.0, %v703
      %705 = vmatmul.f32.gmra.mxu0 %v625
      %v706 = vpop.f32.mrf.mxu0
      %v707 = vadd.f32 0.0, %v706
      %708 = vmatmul.f32.gmra.mxu0 %v626
      %v709 = vpop.f32.mrf.mxu0
      %v710 = vadd.f32 0.0, %v709
      %711 = vmatmul.f32.gmra.mxu0 %v627
      %v712 = vpop.f32.mrf.mxu0
      %v713 = vadd.f32 0.0, %v712
      %714 = vmatmul.f32.gmra.mxu0 %v628
      %v715 = vpop.f32.mrf.mxu0
      %v716 = vadd.f32 0.0, %v715
      %717 = vmatmul.f32.gmra.mxu0 %v629
      %v718 = vpop.f32.mrf.mxu0
      %v719 = vadd.f32 0.0, %v718
      %720 = vmatmul.f32.gmra.mxu0 %v630
      %v721 = vpop.f32.mrf.mxu0
      %v722 = vadd.f32 0.0, %v721
      %723 = vmatmul.f32.gmra.mxu0 %v631
      %v724 = vpop.f32.mrf.mxu0
      %v725 = vadd.f32 0.0, %v724
      %726 = vmatmul.f32.gmra.mxu0 %v632
      %v727 = vpop.f32.mrf.mxu0
      %v728 = vadd.f32 0.0, %v727
      %729 = vdwg.mxu0
      %730 = vmatpush.msra.mxu0 %v664
      %731 = vmatpush.msra.mxu0 %v662
      %732 = vmatpush.msra.mxu0 %v660
      %733 = vmatpush.msra.mxu0 %v658
      %734 = vmatpush.msra.mxu0 %v656
      %735 = vmatpush.msra.mxu0 %v654
      %736 = vmatpush.msra.mxu0 %v652
      %737 = vmatpush.msra.mxu0 %v650
      %738 = vmatpush.msra.mxu0 %v648
      %739 = vmatpush.msra.mxu0 %v646
      %740 = vmatpush.msra.mxu0 %v644
      %741 = vmatpush.msra.mxu0 %v642
      %742 = vmatpush.msra.mxu0 %v640
      %743 = vmatpush.msra.mxu0 %v638
      %744 = vmatpush.msra.mxu0 %v636
      %745 = vmatpush.msra.mxu0 %v634
      %746 = vmatmul.f32.gmra.mxu0 %v617
      %v747 = vpop.f32.mrf.mxu0
      %v748 = vadd.f32 0.0, %v747
      %749 = vmatmul.f32.gmra.mxu0 %v618
      %v750 = vpop.f32.mrf.mxu0
      %v751 = vadd.f32 0.0, %v750
      %752 = vmatmul.f32.gmra.mxu0 %v619
      %v753 = vpop.f32.mrf.mxu0
      %v754 = vadd.f32 0.0, %v753
      %755 = vmatmul.f32.gmra.mxu0 %v620
      %v756 = vpop.f32.mrf.mxu0
      %v757 = vadd.f32 0.0, %v756
      %758 = vmatmul.f32.gmra.mxu0 %v621
      %v759 = vpop.f32.mrf.mxu0
      %v760 = vadd.f32 0.0, %v759
      %761 = vmatmul.f32.gmra.mxu0 %v622
      %v762 = vpop.f32.mrf.mxu0
      %v763 = vadd.f32 0.0, %v762
      %764 = vmatmul.f32.gmra.mxu0 %v623
      %v765 = vpop.f32.mrf.mxu0
      %v766 = vadd.f32 0.0, %v765
      %767 = vmatmul.f32.gmra.mxu0 %v624
      %v768 = vpop.f32.mrf.mxu0
      %v769 = vadd.f32 0.0, %v768
      %770 = vmatmul.f32.gmra.mxu0 %v625
      %v771 = vpop.f32.mrf.mxu0
      %v772 = vadd.f32 0.0, %v771
      %773 = vmatmul.f32.gmra.mxu0 %v626
      %v774 = vpop.f32.mrf.mxu0
      %v775 = vadd.f32 0.0, %v774
      %776 = vmatmul.f32.gmra.mxu0 %v627
      %v777 = vpop.f32.mrf.mxu0
      %v778 = vadd.f32 0.0, %v777
      %779 = vmatmul.f32.gmra.mxu0 %v628
      %v780 = vpop.f32.mrf.mxu0
      %v781 = vadd.f32 0.0, %v780
      %782 = vmatmul.f32.gmra.mxu0 %v629
      %v783 = vpop.f32.mrf.mxu0
      %v784 = vadd.f32 0.0, %v783
      %785 = vmatmul.f32.gmra.mxu0 %v630
      %v786 = vpop.f32.mrf.mxu0
      %v787 = vadd.f32 0.0, %v786
      %788 = vmatmul.f32.gmra.mxu0 %v631
      %v789 = vpop.f32.mrf.mxu0
      %v790 = vadd.f32 0.0, %v789
      %791 = vmatmul.f32.gmra.mxu0 %v632
      %v792 = vpop.f32.mrf.mxu0
      %v793 = vadd.f32 0.0, %v792
      %794 = vdwg.mxu0
      %vm795 = vcmp.gt.f32.partialorder %v424, 0.0
      %vm796 = vcmp.gt.f32.partialorder %v425, 0.0
      %vm797 = vcmp.gt.f32.partialorder %v426, 0.0
      %vm798 = vcmp.gt.f32.partialorder %v427, 0.0
      %vm799 = vcmp.gt.f32.partialorder %v428, 0.0
      %vm800 = vcmp.gt.f32.partialorder %v429, 0.0
      %vm801 = vcmp.gt.f32.partialorder %v430, 0.0
      %vm802 = vcmp.gt.f32.partialorder %v431, 0.0
      %vm803 = vcmp.gt.f32.partialorder %v432, 0.0
      %vm804 = vcmp.gt.f32.partialorder %v433, 0.0
      %vm805 = vcmp.gt.f32.partialorder %v434, 0.0
      %vm806 = vcmp.gt.f32.partialorder %v435, 0.0
      %vm807 = vcmp.gt.f32.partialorder %v436, 0.0
      %vm808 = vcmp.gt.f32.partialorder %v437, 0.0
      %vm809 = vcmp.gt.f32.partialorder %v438, 0.0
      %vm810 = vcmp.gt.f32.partialorder %v439, 0.0
      %v811 = vsel %vm795, 1, 0
      %v812 = vsel %vm796, 1, 0
      %v813 = vsel %vm797, 1, 0
      %v814 = vsel %vm798, 1, 0
      %v815 = vsel %vm799, 1, 0
      %v816 = vsel %vm800, 1, 0
      %v817 = vsel %vm801, 1, 0
      %v818 = vsel %vm802, 1, 0
      %v819 = vsel %vm803, 1, 0
      %v820 = vsel %vm804, 1, 0
      %v821 = vsel %vm805, 1, 0
      %v822 = vsel %vm806, 1, 0
      %v823 = vsel %vm807, 1, 0
      %v824 = vsel %vm808, 1, 0
      %v825 = vsel %vm809, 1, 0
      %v826 = vsel %vm810, 1, 0
      %827 = vset.pattern.permute.xlu0 1
      %828 = vperm.xlu0 %827, %v811
      %v829 = vpop.permute.xlu0 %828
      %830 = vset.pattern.permute.xlu0 1
      %831 = vperm.xlu0 %830, %v812
      %v832 = vpop.permute.xlu0 %831
      %833 = vset.pattern.permute.xlu0 1
      %834 = vperm.xlu0 %833, %v813
      %v835 = vpop.permute.xlu0 %834
      %836 = vset.pattern.permute.xlu0 1
      %837 = vperm.xlu0 %836, %v814
      %v838 = vpop.permute.xlu0 %837
      %839 = vset.pattern.permute.xlu0 1
      %840 = vperm.xlu0 %839, %v815
      %v841 = vpop.permute.xlu0 %840
      %842 = vset.pattern.permute.xlu0 1
      %843 = vperm.xlu0 %842, %v816
      %v844 = vpop.permute.xlu0 %843
      %845 = vset.pattern.permute.xlu0 1
      %846 = vperm.xlu0 %845, %v817
      %v847 = vpop.permute.xlu0 %846
      %848 = vset.pattern.permute.xlu0 1
      %849 = vperm.xlu0 %848, %v818
      %v850 = vpop.permute.xlu0 %849
      %851 = vset.pattern.permute.xlu0 1
      %852 = vperm.xlu0 %851, %v819
      %v853 = vpop.permute.xlu0 %852
      %854 = vset.pattern.permute.xlu0 1
      %855 = vperm.xlu0 %854, %v820
      %v856 = vpop.permute.xlu0 %855
      %857 = vset.pattern.permute.xlu0 1
      %858 = vperm.xlu0 %857, %v821
      %v859 = vpop.permute.xlu0 %858
      %860 = vset.pattern.permute.xlu0 1
      %861 = vperm.xlu0 %860, %v822
      %v862 = vpop.permute.xlu0 %861
      %863 = vset.pattern.permute.xlu0 1
      %864 = vperm.xlu0 %863, %v823
      %v865 = vpop.permute.xlu0 %864
      %866 = vset.pattern.permute.xlu0 1
      %867 = vperm.xlu0 %866, %v824
      %v868 = vpop.permute.xlu0 %867
      %869 = vset.pattern.permute.xlu0 1
      %870 = vperm.xlu0 %869, %v825
      %v871 = vpop.permute.xlu0 %870
      %872 = vset.pattern.permute.xlu0 1
      %873 = vperm.xlu0 %872, %v826
      %v874 = vpop.permute.xlu0 %873
      %vm875 = vcmp.eq.s32.totalorder %v829, 1
      %vm876 = vcmp.eq.s32.totalorder %v832, 1
      %vm877 = vcmp.eq.s32.totalorder %v835, 1
      %vm878 = vcmp.eq.s32.totalorder %v838, 1
      %vm879 = vcmp.eq.s32.totalorder %v841, 1
      %vm880 = vcmp.eq.s32.totalorder %v844, 1
      %vm881 = vcmp.eq.s32.totalorder %v847, 1
      %vm882 = vcmp.eq.s32.totalorder %v850, 1
      %vm883 = vcmp.eq.s32.totalorder %v853, 1
      %vm884 = vcmp.eq.s32.totalorder %v856, 1
      %vm885 = vcmp.eq.s32.totalorder %v859, 1
      %vm886 = vcmp.eq.s32.totalorder %v862, 1
      %vm887 = vcmp.eq.s32.totalorder %v865, 1
      %vm888 = vcmp.eq.s32.totalorder %v868, 1
      %vm889 = vcmp.eq.s32.totalorder %v871, 1
      %vm890 = vcmp.eq.s32.totalorder %v874, 1
      %v891 = vsel %vm875, %v683, %v748
      %v892 = vsel %vm876, %v686, %v751
      %v893 = vsel %vm877, %v689, %v754
      %v894 = vsel %vm878, %v692, %v757
      %v895 = vsel %vm879, %v695, %v760
      %v896 = vsel %vm880, %v698, %v763
      %v897 = vsel %vm881, %v701, %v766
      %v898 = vsel %vm882, %v704, %v769
      %v899 = vsel %vm883, %v707, %v772
      %v900 = vsel %vm884, %v710, %v775
      %v901 = vsel %vm885, %v713, %v778
      %v902 = vsel %vm886, %v716, %v781
      %v903 = vsel %vm887, %v719, %v784
      %v904 = vsel %vm888, %v722, %v787
      %v905 = vsel %vm889, %v725, %v790
      %v906 = vsel %vm890, %v728, %v793
      %v907 = vld [vmem:[#allocation9] sm:$0xff]
      %v908 = vld [vmem:[#allocation9 + $0x8] sm:$0xff]
      %v909 = vld [vmem:[#allocation9 + $0x10] sm:$0xff]
      %v910 = vld [vmem:[#allocation9 + $0x18] sm:$0xff]
      %v911 = vld [vmem:[#allocation9 + $0x20] sm:$0xff]
      %v912 = vld [vmem:[#allocation9 + $0x28] sm:$0xff]
      %v913 = vld [vmem:[#allocation9 + $0x30] sm:$0xff]
      %v914 = vld [vmem:[#allocation9 + $0x38] sm:$0xff]
      %v915 = vld [vmem:[#allocation9 + $0x40] sm:$0xff]
      %v916 = vld [vmem:[#allocation9 + $0x48] sm:$0xff]
      %v917 = vld [vmem:[#allocation9 + $0x50] sm:$0xff]
      %v918 = vld [vmem:[#allocation9 + $0x58] sm:$0xff]
      %v919 = vld [vmem:[#allocation9 + $0x60] sm:$0xff]
      %v920 = vld [vmem:[#allocation9 + $0x68] sm:$0xff]
      %v921 = vld [vmem:[#allocation9 + $0x70] sm:$0xff]
      %v922 = vld [vmem:[#allocation9 + $0x78] sm:$0xff]
      %v923 = vld [vmem:[#allocation14] sm:$0xff]
      %v924 = vld [vmem:[#allocation14 + $0x8] sm:$0xff]
      %v925 = vld [vmem:[#allocation14 + $0x10] sm:$0xff]
      %v926 = vld [vmem:[#allocation14 + $0x18] sm:$0xff]
      %v927 = vld [vmem:[#allocation14 + $0x20] sm:$0xff]
      %v928 = vld [vmem:[#allocation14 + $0x28] sm:$0xff]
      %v929 = vld [vmem:[#allocation14 + $0x30] sm:$0xff]
      %v930 = vld [vmem:[#allocation14 + $0x38] sm:$0xff]
      %v931 = vld [vmem:[#allocation14 + $0x40] sm:$0xff]
      %v932 = vld [vmem:[#allocation14 + $0x48] sm:$0xff]
      %v933 = vld [vmem:[#allocation14 + $0x50] sm:$0xff]
      %v934 = vld [vmem:[#allocation14 + $0x58] sm:$0xff]
      %v935 = vld [vmem:[#allocation14 + $0x60] sm:$0xff]
      %v936 = vld [vmem:[#allocation14 + $0x68] sm:$0xff]
      %v937 = vld [vmem:[#allocation14 + $0x70] sm:$0xff]
      %v938 = vld [vmem:[#allocation14 + $0x78] sm:$0xff]
      %v939 = vld [vmem:[%s10] sm:$0x1]
      %v941 = vperm.slane %v939, 0
      %943 = vmatpush.msra.mxu0 %v938
      %944 = vmatpush.msra.mxu0 %v937
      %945 = vmatpush.msra.mxu0 %v936
      %946 = vmatpush.msra.mxu0 %v935
      %947 = vmatpush.msra.mxu0 %v934
      %948 = vmatpush.msra.mxu0 %v933
      %949 = vmatpush.msra.mxu0 %v932
      %950 = vmatpush.msra.mxu0 %v931
      %951 = vmatpush.msra.mxu0 %v930
      %952 = vmatpush.msra.mxu0 %v929
      %953 = vmatpush.msra.mxu0 %v928
      %954 = vmatpush.msra.mxu0 %v927
      %955 = vmatpush.msra.mxu0 %v926
      %956 = vmatpush.msra.mxu0 %v925
      %957 = vmatpush.msra.mxu0 %v924
      %958 = vmatpush.msra.mxu0 %v923
      %959 = vmatmul.f32.gmra.mxu0 %v907
      %v960 = vpop.f32.mrf.mxu0
      %v961 = vadd.f32 %v941, %v960
      %962 = vmatmul.f32.gmra.mxu0 %v908
      %v963 = vpop.f32.mrf.mxu0
      %v964 = vadd.f32 %v941, %v963
      %965 = vmatmul.f32.gmra.mxu0 %v909
      %v966 = vpop.f32.mrf.mxu0
      %v967 = vadd.f32 %v941, %v966
      %968 = vmatmul.f32.gmra.mxu0 %v910
      %v969 = vpop.f32.mrf.mxu0
      %v970 = vadd.f32 %v941, %v969
      %971 = vmatmul.f32.gmra.mxu0 %v911
      %v972 = vpop.f32.mrf.mxu0
      %v973 = vadd.f32 %v941, %v972
      %974 = vmatmul.f32.gmra.mxu0 %v912
      %v975 = vpop.f32.mrf.mxu0
      %v976 = vadd.f32 %v941, %v975
      %977 = vmatmul.f32.gmra.mxu0 %v913
      %v978 = vpop.f32.mrf.mxu0
      %v979 = vadd.f32 %v941, %v978
      %980 = vmatmul.f32.gmra.mxu0 %v914
      %v981 = vpop.f32.mrf.mxu0
      %v982 = vadd.f32 %v941, %v981
      %983 = vmatmul.f32.gmra.mxu0 %v915
      %v984 = vpop.f32.mrf.mxu0
      %v985 = vadd.f32 %v941, %v984
      %986 = vmatmul.f32.gmra.mxu0 %v916
      %v987 = vpop.f32.mrf.mxu0
      %v988 = vadd.f32 %v941, %v987
      %989 = vmatmul.f32.gmra.mxu0 %v917
      %v990 = vpop.f32.mrf.mxu0
      %v991 = vadd.f32 %v941, %v990
      %992 = vmatmul.f32.gmra.mxu0 %v918
      %v993 = vpop.f32.mrf.mxu0
      %v994 = vadd.f32 %v941, %v993
      %995 = vmatmul.f32.gmra.mxu0 %v919
      %v996 = vpop.f32.mrf.mxu0
      %v997 = vadd.f32 %v941, %v996
      %998 = vmatmul.f32.gmra.mxu0 %v920
      %v999 = vpop.f32.mrf.mxu0
      %v1000 = vadd.f32 %v941, %v999
      %1001 = vmatmul.f32.gmra.mxu0 %v921
      %v1002 = vpop.f32.mrf.mxu0
      %v1003 = vadd.f32 %v941, %v1002
      %1004 = vmatmul.f32.gmra.mxu0 %v922
      %v1005 = vpop.f32.mrf.mxu0
      %v1006 = vadd.f32 %v941, %v1005
      %1007 = vdwg.mxu0
      %v1008 = vxor.u32 %v961, 2147483648
      %v1009 = vxor.u32 %v964, 2147483648
      %v1010 = vxor.u32 %v967, 2147483648
      %v1011 = vxor.u32 %v970, 2147483648
      %v1012 = vxor.u32 %v973, 2147483648
      %v1013 = vxor.u32 %v976, 2147483648
      %v1014 = vxor.u32 %v979, 2147483648
      %v1015 = vxor.u32 %v982, 2147483648
      %v1016 = vxor.u32 %v985, 2147483648
      %v1017 = vxor.u32 %v988, 2147483648
      %v1018 = vxor.u32 %v991, 2147483648
      %v1019 = vxor.u32 %v994, 2147483648
      %v1020 = vxor.u32 %v997, 2147483648
      %v1021 = vxor.u32 %v1000, 2147483648
      %v1022 = vxor.u32 %v1003, 2147483648
      %v1023 = vxor.u32 %v1006, 2147483648
      %v1024 = vmul.f32 %v1008, 1.442695
      %v1025 = vpow.pop %v1024
      %v1026 = vmul.f32 %v1009, 1.442695
      %v1027 = vpow.pop %v1026
      %v1028 = vmul.f32 %v1010, 1.442695
      %v1029 = vpow.pop %v1028
      %v1030 = vmul.f32 %v1011, 1.442695
      %v1031 = vpow.pop %v1030
      %v1032 = vmul.f32 %v1012, 1.442695
      %v1033 = vpow.pop %v1032
      %v1034 = vmul.f32 %v1013, 1.442695
      %v1035 = vpow.pop %v1034
      %v1036 = vmul.f32 %v1014, 1.442695
      %v1037 = vpow.pop %v1036
      %v1038 = vmul.f32 %v1015, 1.442695
      %v1039 = vpow.pop %v1038
      %v1040 = vmul.f32 %v1016, 1.442695
      %v1041 = vpow.pop %v1040
      %v1042 = vmul.f32 %v1017, 1.442695
      %v1043 = vpow.pop %v1042
      %v1044 = vmul.f32 %v1018, 1.442695
      %v1045 = vpow.pop %v1044
      %v1046 = vmul.f32 %v1019, 1.442695
      %v1047 = vpow.pop %v1046
      %v1048 = vmul.f32 %v1020, 1.442695
      %v1049 = vpow.pop %v1048
      %v1050 = vmul.f32 %v1021, 1.442695
      %v1051 = vpow.pop %v1050
      %v1052 = vmul.f32 %v1022, 1.442695
      %v1053 = vpow.pop %v1052
      %v1054 = vmul.f32 %v1023, 1.442695
      %v1055 = vpow.pop %v1054
      %v1056 = vadd.f32 %v1025, 1.0
      %v1057 = vadd.f32 %v1027, 1.0
      %v1058 = vadd.f32 %v1029, 1.0
      %v1059 = vadd.f32 %v1031, 1.0
      %v1060 = vadd.f32 %v1033, 1.0
      %v1061 = vadd.f32 %v1035, 1.0
      %v1062 = vadd.f32 %v1037, 1.0
      %v1063 = vadd.f32 %v1039, 1.0
      %v1064 = vadd.f32 %v1041, 1.0
      %v1065 = vadd.f32 %v1043, 1.0
      %v1066 = vadd.f32 %v1045, 1.0
      %v1067 = vadd.f32 %v1047, 1.0
      %v1068 = vadd.f32 %v1049, 1.0
      %v1069 = vadd.f32 %v1051, 1.0
      %v1070 = vadd.f32 %v1053, 1.0
      %v1071 = vadd.f32 %v1055, 1.0
      %v1072 = vrcp.pop %v1056
      %v1073 = vmul.f32 %v1056, %v1072
      %v1074 = vsub.f32 1.0, %v1073
      %v1075 = vmul.f32 %v1072, %v1074
      %v1076 = vadd.f32 %v1072, %v1075
      %vm1077 = vweird.f32 %v1056
      %vm1078 = vweird.f32 %v1072
      %vm1079 = vmor %vm1077, %vm1078
      %v1080 = vsel %vm1079, %v1072, %v1076
      %v1081 = vand.u32 2147483647, %v1056
      %vm1082 = vcmp.eq.f32.partialorder %v1081, 8.507059e+37
      %v1083 = vand.u32 %v1056, 2147483648
      %v1084 = vor.u32 1.1754944e-38, %v1083
      %v1085 = vsel %vm1082, %v1084, %v1080
      %v1086 = vmul.f32 1.0, %v1085
      %v1087 = vrcp.pop %v1057
      %v1088 = vmul.f32 %v1057, %v1087
      %v1089 = vsub.f32 1.0, %v1088
      %v1090 = vmul.f32 %v1087, %v1089
      %v1091 = vadd.f32 %v1087, %v1090
      %vm1092 = vweird.f32 %v1057
      %vm1093 = vweird.f32 %v1087
      %vm1094 = vmor %vm1092, %vm1093
      %v1095 = vsel %vm1094, %v1087, %v1091
      %v1096 = vand.u32 2147483647, %v1057
      %vm1097 = vcmp.eq.f32.partialorder %v1096, 8.507059e+37
      %v1098 = vand.u32 %v1057, 2147483648
      %v1099 = vor.u32 1.1754944e-38, %v1098
      %v1100 = vsel %vm1097, %v1099, %v1095
      %v1101 = vmul.f32 1.0, %v1100
      %v1102 = vrcp.pop %v1058
      %v1103 = vmul.f32 %v1058, %v1102
      %v1104 = vsub.f32 1.0, %v1103
      %v1105 = vmul.f32 %v1102, %v1104
      %v1106 = vadd.f32 %v1102, %v1105
      %vm1107 = vweird.f32 %v1058
      %vm1108 = vweird.f32 %v1102
      %vm1109 = vmor %vm1107, %vm1108
      %v1110 = vsel %vm1109, %v1102, %v1106
      %v1111 = vand.u32 2147483647, %v1058
      %vm1112 = vcmp.eq.f32.partialorder %v1111, 8.507059e+37
      %v1113 = vand.u32 %v1058, 2147483648
      %v1114 = vor.u32 1.1754944e-38, %v1113
      %v1115 = vsel %vm1112, %v1114, %v1110
      %v1116 = vmul.f32 1.0, %v1115
      %v1117 = vrcp.pop %v1059
      %v1118 = vmul.f32 %v1059, %v1117
      %v1119 = vsub.f32 1.0, %v1118
      %v1120 = vmul.f32 %v1117, %v1119
      %v1121 = vadd.f32 %v1117, %v1120
      %vm1122 = vweird.f32 %v1059
      %vm1123 = vweird.f32 %v1117
      %vm1124 = vmor %vm1122, %vm1123
      %v1125 = vsel %vm1124, %v1117, %v1121
      %v1126 = vand.u32 2147483647, %v1059
      %vm1127 = vcmp.eq.f32.partialorder %v1126, 8.507059e+37
      %v1128 = vand.u32 %v1059, 2147483648
      %v1129 = vor.u32 1.1754944e-38, %v1128
      %v1130 = vsel %vm1127, %v1129, %v1125
      %v1131 = vmul.f32 1.0, %v1130
      %v1132 = vrcp.pop %v1060
      %v1133 = vmul.f32 %v1060, %v1132
      %v1134 = vsub.f32 1.0, %v1133
      %v1135 = vmul.f32 %v1132, %v1134
      %v1136 = vadd.f32 %v1132, %v1135
      %vm1137 = vweird.f32 %v1060
      %vm1138 = vweird.f32 %v1132
      %vm1139 = vmor %vm1137, %vm1138
      %v1140 = vsel %vm1139, %v1132, %v1136
      %v1141 = vand.u32 2147483647, %v1060
      %vm1142 = vcmp.eq.f32.partialorder %v1141, 8.507059e+37
      %v1143 = vand.u32 %v1060, 2147483648
      %v1144 = vor.u32 1.1754944e-38, %v1143
      %v1145 = vsel %vm1142, %v1144, %v1140
      %v1146 = vmul.f32 1.0, %v1145
      %v1147 = vrcp.pop %v1061
      %v1148 = vmul.f32 %v1061, %v1147
      %v1149 = vsub.f32 1.0, %v1148
      %v1150 = vmul.f32 %v1147, %v1149
      %v1151 = vadd.f32 %v1147, %v1150
      %vm1152 = vweird.f32 %v1061
      %vm1153 = vweird.f32 %v1147
      %vm1154 = vmor %vm1152, %vm1153
      %v1155 = vsel %vm1154, %v1147, %v1151
      %v1156 = vand.u32 2147483647, %v1061
      %vm1157 = vcmp.eq.f32.partialorder %v1156, 8.507059e+37
      %v1158 = vand.u32 %v1061, 2147483648
      %v1159 = vor.u32 1.1754944e-38, %v1158
      %v1160 = vsel %vm1157, %v1159, %v1155
      %v1161 = vmul.f32 1.0, %v1160
      %v1162 = vrcp.pop %v1062
      %v1163 = vmul.f32 %v1062, %v1162
      %v1164 = vsub.f32 1.0, %v1163
      %v1165 = vmul.f32 %v1162, %v1164
      %v1166 = vadd.f32 %v1162, %v1165
      %vm1167 = vweird.f32 %v1062
      %vm1168 = vweird.f32 %v1162
      %vm1169 = vmor %vm1167, %vm1168
      %v1170 = vsel %vm1169, %v1162, %v1166
      %v1171 = vand.u32 2147483647, %v1062
      %vm1172 = vcmp.eq.f32.partialorder %v1171, 8.507059e+37
      %v1173 = vand.u32 %v1062, 2147483648
      %v1174 = vor.u32 1.1754944e-38, %v1173
      %v1175 = vsel %vm1172, %v1174, %v1170
      %v1176 = vmul.f32 1.0, %v1175
      %v1177 = vrcp.pop %v1063
      %v1178 = vmul.f32 %v1063, %v1177
      %v1179 = vsub.f32 1.0, %v1178
      %v1180 = vmul.f32 %v1177, %v1179
      %v1181 = vadd.f32 %v1177, %v1180
      %vm1182 = vweird.f32 %v1063
      %vm1183 = vweird.f32 %v1177
      %vm1184 = vmor %vm1182, %vm1183
      %v1185 = vsel %vm1184, %v1177, %v1181
      %v1186 = vand.u32 2147483647, %v1063
      %vm1187 = vcmp.eq.f32.partialorder %v1186, 8.507059e+37
      %v1188 = vand.u32 %v1063, 2147483648
      %v1189 = vor.u32 1.1754944e-38, %v1188
      %v1190 = vsel %vm1187, %v1189, %v1185
      %v1191 = vmul.f32 1.0, %v1190
      %v1192 = vrcp.pop %v1064
      %v1193 = vmul.f32 %v1064, %v1192
      %v1194 = vsub.f32 1.0, %v1193
      %v1195 = vmul.f32 %v1192, %v1194
      %v1196 = vadd.f32 %v1192, %v1195
      %vm1197 = vweird.f32 %v1064
      %vm1198 = vweird.f32 %v1192
      %vm1199 = vmor %vm1197, %vm1198
      %v1200 = vsel %vm1199, %v1192, %v1196
      %v1201 = vand.u32 2147483647, %v1064
      %vm1202 = vcmp.eq.f32.partialorder %v1201, 8.507059e+37
      %v1203 = vand.u32 %v1064, 2147483648
      %v1204 = vor.u32 1.1754944e-38, %v1203
      %v1205 = vsel %vm1202, %v1204, %v1200
      %v1206 = vmul.f32 1.0, %v1205
      %v1207 = vrcp.pop %v1065
      %v1208 = vmul.f32 %v1065, %v1207
      %v1209 = vsub.f32 1.0, %v1208
      %v1210 = vmul.f32 %v1207, %v1209
      %v1211 = vadd.f32 %v1207, %v1210
      %vm1212 = vweird.f32 %v1065
      %vm1213 = vweird.f32 %v1207
      %vm1214 = vmor %vm1212, %vm1213
      %v1215 = vsel %vm1214, %v1207, %v1211
      %v1216 = vand.u32 2147483647, %v1065
      %vm1217 = vcmp.eq.f32.partialorder %v1216, 8.507059e+37
      %v1218 = vand.u32 %v1065, 2147483648
      %v1219 = vor.u32 1.1754944e-38, %v1218
      %v1220 = vsel %vm1217, %v1219, %v1215
      %v1221 = vmul.f32 1.0, %v1220
      %v1222 = vrcp.pop %v1066
      %v1223 = vmul.f32 %v1066, %v1222
      %v1224 = vsub.f32 1.0, %v1223
      %v1225 = vmul.f32 %v1222, %v1224
      %v1226 = vadd.f32 %v1222, %v1225
      %vm1227 = vweird.f32 %v1066
      %vm1228 = vweird.f32 %v1222
      %vm1229 = vmor %vm1227, %vm1228
      %v1230 = vsel %vm1229, %v1222, %v1226
      %v1231 = vand.u32 2147483647, %v1066
      %vm1232 = vcmp.eq.f32.partialorder %v1231, 8.507059e+37
      %v1233 = vand.u32 %v1066, 2147483648
      %v1234 = vor.u32 1.1754944e-38, %v1233
      %v1235 = vsel %vm1232, %v1234, %v1230
      %v1236 = vmul.f32 1.0, %v1235
      %v1237 = vrcp.pop %v1067
      %v1238 = vmul.f32 %v1067, %v1237
      %v1239 = vsub.f32 1.0, %v1238
      %v1240 = vmul.f32 %v1237, %v1239
      %v1241 = vadd.f32 %v1237, %v1240
      %vm1242 = vweird.f32 %v1067
      %vm1243 = vweird.f32 %v1237
      %vm1244 = vmor %vm1242, %vm1243
      %v1245 = vsel %vm1244, %v1237, %v1241
      %v1246 = vand.u32 2147483647, %v1067
      %vm1247 = vcmp.eq.f32.partialorder %v1246, 8.507059e+37
      %v1248 = vand.u32 %v1067, 2147483648
      %v1249 = vor.u32 1.1754944e-38, %v1248
      %v1250 = vsel %vm1247, %v1249, %v1245
      %v1251 = vmul.f32 1.0, %v1250
      %v1252 = vrcp.pop %v1068
      %v1253 = vmul.f32 %v1068, %v1252
      %v1254 = vsub.f32 1.0, %v1253
      %v1255 = vmul.f32 %v1252, %v1254
      %v1256 = vadd.f32 %v1252, %v1255
      %vm1257 = vweird.f32 %v1068
      %vm1258 = vweird.f32 %v1252
      %vm1259 = vmor %vm1257, %vm1258
      %v1260 = vsel %vm1259, %v1252, %v1256
      %v1261 = vand.u32 2147483647, %v1068
      %vm1262 = vcmp.eq.f32.partialorder %v1261, 8.507059e+37
      %v1263 = vand.u32 %v1068, 2147483648
      %v1264 = vor.u32 1.1754944e-38, %v1263
      %v1265 = vsel %vm1262, %v1264, %v1260
      %v1266 = vmul.f32 1.0, %v1265
      %v1267 = vrcp.pop %v1069
      %v1268 = vmul.f32 %v1069, %v1267
      %v1269 = vsub.f32 1.0, %v1268
      %v1270 = vmul.f32 %v1267, %v1269
      %v1271 = vadd.f32 %v1267, %v1270
      %vm1272 = vweird.f32 %v1069
      %vm1273 = vweird.f32 %v1267
      %vm1274 = vmor %vm1272, %vm1273
      %v1275 = vsel %vm1274, %v1267, %v1271
      %v1276 = vand.u32 2147483647, %v1069
      %vm1277 = vcmp.eq.f32.partialorder %v1276, 8.507059e+37
      %v1278 = vand.u32 %v1069, 2147483648
      %v1279 = vor.u32 1.1754944e-38, %v1278
      %v1280 = vsel %vm1277, %v1279, %v1275
      %v1281 = vmul.f32 1.0, %v1280
      %v1282 = vrcp.pop %v1070
      %v1283 = vmul.f32 %v1070, %v1282
      %v1284 = vsub.f32 1.0, %v1283
      %v1285 = vmul.f32 %v1282, %v1284
      %v1286 = vadd.f32 %v1282, %v1285
      %vm1287 = vweird.f32 %v1070
      %vm1288 = vweird.f32 %v1282
      %vm1289 = vmor %vm1287, %vm1288
      %v1290 = vsel %vm1289, %v1282, %v1286
      %v1291 = vand.u32 2147483647, %v1070
      %vm1292 = vcmp.eq.f32.partialorder %v1291, 8.507059e+37
      %v1293 = vand.u32 %v1070, 2147483648
      %v1294 = vor.u32 1.1754944e-38, %v1293
      %v1295 = vsel %vm1292, %v1294, %v1290
      %v1296 = vmul.f32 1.0, %v1295
      %v1297 = vrcp.pop %v1071
      %v1298 = vmul.f32 %v1071, %v1297
      %v1299 = vsub.f32 1.0, %v1298
      %v1300 = vmul.f32 %v1297, %v1299
      %v1301 = vadd.f32 %v1297, %v1300
      %vm1302 = vweird.f32 %v1071
      %vm1303 = vweird.f32 %v1297
      %vm1304 = vmor %vm1302, %vm1303
      %v1305 = vsel %vm1304, %v1297, %v1301
      %v1306 = vand.u32 2147483647, %v1071
      %vm1307 = vcmp.eq.f32.partialorder %v1306, 8.507059e+37
      %v1308 = vand.u32 %v1071, 2147483648
      %v1309 = vor.u32 1.1754944e-38, %v1308
      %v1310 = vsel %vm1307, %v1309, %v1305
      %v1311 = vmul.f32 1.0, %v1310
      %v1312 = vadd.f32 %v601, %v891
      %v1313 = vadd.f32 %v602, %v892
      %v1314 = vadd.f32 %v603, %v893
      %v1315 = vadd.f32 %v604, %v894
      %v1316 = vadd.f32 %v605, %v895
      %v1317 = vadd.f32 %v606, %v896
      %v1318 = vadd.f32 %v607, %v897
      %v1319 = vadd.f32 %v608, %v898
      %v1320 = vadd.f32 %v609, %v899
      %v1321 = vadd.f32 %v610, %v900
      %v1322 = vadd.f32 %v611, %v901
      %v1323 = vadd.f32 %v612, %v902
      %v1324 = vadd.f32 %v613, %v903
      %v1325 = vadd.f32 %v614, %v904
      %v1326 = vadd.f32 %v615, %v905
      %v1327 = vadd.f32 %v616, %v906
      %v1328 = vmul.f32 %v1086, %v1312
      %v1329 = vmul.f32 %v1101, %v1313
      %v1330 = vmul.f32 %v1116, %v1314
      %v1331 = vmul.f32 %v1131, %v1315
      %v1332 = vmul.f32 %v1146, %v1316
      %v1333 = vmul.f32 %v1161, %v1317
      %v1334 = vmul.f32 %v1176, %v1318
      %v1335 = vmul.f32 %v1191, %v1319
      %v1336 = vmul.f32 %v1206, %v1320
      %v1337 = vmul.f32 %v1221, %v1321
      %v1338 = vmul.f32 %v1236, %v1322
      %v1339 = vmul.f32 %v1251, %v1323
      %v1340 = vmul.f32 %v1266, %v1324
      %v1341 = vmul.f32 %v1281, %v1325
      %v1342 = vmul.f32 %v1296, %v1326
      %v1343 = vmul.f32 %v1311, %v1327
      %v1344 = vsub.f32 1.0, %v1086
      %v1345 = vsub.f32 1.0, %v1101
      %v1346 = vsub.f32 1.0, %v1116
      %v1347 = vsub.f32 1.0, %v1131
      %v1348 = vsub.f32 1.0, %v1146
      %v1349 = vsub.f32 1.0, %v1161
      %v1350 = vsub.f32 1.0, %v1176
      %v1351 = vsub.f32 1.0, %v1191
      %v1352 = vsub.f32 1.0, %v1206
      %v1353 = vsub.f32 1.0, %v1221
      %v1354 = vsub.f32 1.0, %v1236
      %v1355 = vsub.f32 1.0, %v1251
      %v1356 = vsub.f32 1.0, %v1266
      %v1357 = vsub.f32 1.0, %v1281
      %v1358 = vsub.f32 1.0, %v1296
      %v1359 = vsub.f32 1.0, %v1311
      %v1360 = vmul.f32 %v1344, %v907
      %v1361 = vmul.f32 %v1345, %v908
      %v1362 = vmul.f32 %v1346, %v909
      %v1363 = vmul.f32 %v1347, %v910
      %v1364 = vmul.f32 %v1348, %v911
      %v1365 = vmul.f32 %v1349, %v912
      %v1366 = vmul.f32 %v1350, %v913
      %v1367 = vmul.f32 %v1351, %v914
      %v1368 = vmul.f32 %v1352, %v915
      %v1369 = vmul.f32 %v1353, %v916
      %v1370 = vmul.f32 %v1354, %v917
      %v1371 = vmul.f32 %v1355, %v918
      %v1372 = vmul.f32 %v1356, %v919
      %v1373 = vmul.f32 %v1357, %v920
      %v1374 = vmul.f32 %v1358, %v921
      %v1375 = vmul.f32 %v1359, %v922
      %v1376 = vadd.f32 %v1328, %v1360
      %v1377 = vadd.f32 %v1329, %v1361
      %v1378 = vadd.f32 %v1330, %v1362
      %v1379 = vadd.f32 %v1331, %v1363
      %v1380 = vadd.f32 %v1332, %v1364
      %v1381 = vadd.f32 %v1333, %v1365
      %v1382 = vadd.f32 %v1334, %v1366
      %v1383 = vadd.f32 %v1335, %v1367
      %v1384 = vadd.f32 %v1336, %v1368
      %v1385 = vadd.f32 %v1337, %v1369
      %v1386 = vadd.f32 %v1338, %v1370
      %v1387 = vadd.f32 %v1339, %v1371
      %v1388 = vadd.f32 %v1340, %v1372
      %v1389 = vadd.f32 %v1341, %v1373
      %v1390 = vadd.f32 %v1342, %v1374
      %v1391 = vadd.f32 %v1343, %v1375
      %v1392 = vmax.f32 %v1376, 0.0
      %v1393 = vmax.f32 %v1377, 0.0
      %v1394 = vmax.f32 %v1378, 0.0
      %v1395 = vmax.f32 %v1379, 0.0
      %v1396 = vmax.f32 %v1380, 0.0
      %v1397 = vmax.f32 %v1381, 0.0
      %v1398 = vmax.f32 %v1382, 0.0
      %v1399 = vmax.f32 %v1383, 0.0
      %v1400 = vmax.f32 %v1384, 0.0
      %v1401 = vmax.f32 %v1385, 0.0
      %v1402 = vmax.f32 %v1386, 0.0
      %v1403 = vmax.f32 %v1387, 0.0
      %v1404 = vmax.f32 %v1388, 0.0
      %v1405 = vmax.f32 %v1389, 0.0
      %v1406 = vmax.f32 %v1390, 0.0
      %v1407 = vmax.f32 %v1391, 0.0
      %1408 = vst [vmem:[#allocation15] sm:$0xff] %v1392
      %1409 = vst [vmem:[#allocation15 + $0x8] sm:$0xff] %v1393
      %1410 = vst [vmem:[#allocation15 + $0x10] sm:$0xff] %v1394
      %1411 = vst [vmem:[#allocation15 + $0x18] sm:$0xff] %v1395
      %1412 = vst [vmem:[#allocation15 + $0x20] sm:$0xff] %v1396
      %1413 = vst [vmem:[#allocation15 + $0x28] sm:$0xff] %v1397
      %1414 = vst [vmem:[#allocation15 + $0x30] sm:$0xff] %v1398
      %1415 = vst [vmem:[#allocation15 + $0x38] sm:$0xff] %v1399
      %1416 = vst [vmem:[#allocation15 + $0x40] sm:$0xff] %v1400
      %1417 = vst [vmem:[#allocation15 + $0x48] sm:$0xff] %v1401
      %1418 = vst [vmem:[#allocation15 + $0x50] sm:$0xff] %v1402
      %1419 = vst [vmem:[#allocation15 + $0x58] sm:$0xff] %v1403
      %1420 = vst [vmem:[#allocation15 + $0x60] sm:$0xff] %v1404
      %1421 = vst [vmem:[#allocation15 + $0x68] sm:$0xff] %v1405
      %1422 = vst [vmem:[#allocation15 + $0x70] sm:$0xff] %v1406
      %1423 = vst [vmem:[#allocation15 + $0x78] sm:$0xff] %v1407
    $region69: #{tpu_custom_call.1} parent=1 // pred_fallthru
      _
    // Predicated region
    $region70: #{tpu_custom_call.1} parent=1 // pred_check
      _
    $region71: #{tpu_custom_call.1} parent=1 // pred_check_branch
      %1425 = sbr.rel (0) target = $region73
    $region72: #{tpu_custom_call.1} parent=1 // pred_region
      %1427 = vsyncadd [#allocation8], 0
      %s1428 = sshll.u32 [#allocation15], 4
      %s1429 = int_to_ptr.vmem [resolvable:$true] %s1428
      %s1430 = sshll.u32 %s11, 4
      %s1431 = int_to_ptr.hbm [resolvable:$true] %s1430
      %1436 = dma.vmem_to_hbm [thread:$0]  %s1429, 2048, %s1431, [#allocation8], 128, 128, 8
    $region73: #{tpu_custom_call.1} parent=1 // pred_fallthru
      _
    // Predicated region
    $region74: #{tpu_custom_call.1} parent=1 // pred_check
      _
    $region75: #{tpu_custom_call.1} parent=1 // pred_check_branch
      %1438 = sbr.rel (0) target = $region77
    $region76: #{tpu_custom_call.1} parent=1 // pred_region
      %1440 = dma.done [#allocation8], 2048
    $region77: #{tpu_custom_call.1} parent=1 // pred_fallthru
      _
    %1441 = vsyncpa [#allocation7], 1
    %1442 = vsyncpa [#allocation10], 1
    %1443 = vsyncpa [#allocation13], 1
    %1444 = vsyncpa [#allocation8], 1

</llo_original>
